<compile_context>
chip_gen: v7x
topology: tpu7x:2x2x1
jax: 0.10.0
libtpu: 0.0.40
codegen_flags: <defaults>
</compile_context>

<pallas_src>
import jax
import jax.numpy as jnp
from jax.experimental import pallas as pl
from jax.experimental.pallas import tpu as pltpu

AUDIO_DIM = 32
H1 = 256
H2 = 512
PROJ_DIM = 1024

_SINGLE_STEP_MAX_ROWS = 512   # one grid step up to here (fits trivially in VMEM)
_LARGE_TILE = 512             # big-batch tile: multiple of 128 (v5e) and 256 (v6e/v7x)


def _mlp_norm_kernel(x_ref, w1_ref, b1_ref, w2_ref, b2_ref, w3_ref, b3_ref, o_ref):
    # x tile: (TILE_B, 32) f32 -> bf16 for the MXU, f32 accumulation throughout.
    x = x_ref[...].astype(jnp.bfloat16)

    # Layer 1: Linear(32 -> 256) + ReLU
    h1 = jnp.dot(x, w1_ref[...], preferred_element_type=jnp.float32) + b1_ref[...]
    h1 = jnp.maximum(h1, 0.0).astype(jnp.bfloat16)

    # Layer 2: Linear(256 -> 512) + ReLU
    h2 = jnp.dot(h1, w2_ref[...], preferred_element_type=jnp.float32) + b2_ref[...]
    h2 = jnp.maximum(h2, 0.0).astype(jnp.bfloat16)

    # Layer 3: Linear(512 -> 1024)
    out = jnp.dot(h2, w3_ref[...], preferred_element_type=jnp.float32) + b3_ref[...]

    # F.normalize(out, p=2, dim=1) == out / max(||out||, 1e-12)
    #                              == out * rsqrt(max(||out||^2, 1e-24))   (EUP)
    sq = jnp.sum(out * out, axis=1, keepdims=True)
    o_ref[...] = (out * jax.lax.rsqrt(jnp.maximum(sq, 1e-24))).astype(o_ref.dtype)


def _round_up(x, m):
    return ((x + m - 1) // m) * m


def _pick_tiling(n_rows):
    """Returns (tile_rows, padded_rows).

    Small batches: a single grid step (tile == padded rows) -- no per-step
    pipeline overhead and no pointless megacore split.  Large batches: 512-row
    tiles (multiple of both 128 and 256) so the grid axis can be sharded across
    v7x's two TensorCores and the MXU gets full-height LHS panels.
    """
    padded = _round_up(max(n_rows, 8), 8)
    if padded <= _SINGLE_STEP_MAX_ROWS:
        return padded, padded
    tile = _LARGE_TILE
    return tile, _round_up(padded, tile)


def _aud_proj_normalize(x, params, out_dtype=jnp.float32):
    """Runs the aud_proj MLP + L2-normalize on a fused (N, AUDIO_DIM) batch."""
    w1, b1, w2, b2, w3, b3 = params
    n = x.shape[0]
    tile, padded = _pick_tiling(n)
    if padded != n:
        x = jnp.pad(x, ((0, padded - n), (0, 0)))
    grid = (padded // tile,)

    def _resident(shape):
        # Constant block index -> fetched once, stays VMEM-resident across all
        # grid steps.  Buffered(1) -> single VMEM buffer (no double-buffer
        # allocation for the ~1.3 MiB of weights).
        return pl.BlockSpec(shape, lambda i: (0, 0), pipeline_mode=pl.Buffered(1))

    # Advisory cost estimate: lets XLA overlap the weight DMA with neighbors.
    flops = 2 * padded * (AUDIO_DIM * H1 + H1 * H2 + H2 * PROJ_DIM) + 3 * padded * PROJ_DIM
    weight_bytes = (
        w1.size * w1.dtype.itemsize + w2.size * w2.dtype.itemsize
        + w3.size * w3.dtype.itemsize
        + b1.size * b1.dtype.itemsize + b2.size * b2.dtype.itemsize
        + b3.size * b3.dtype.itemsize
    )
    bytes_accessed = (
        padded * AUDIO_DIM * 4
        + weight_bytes
        + padded * PROJ_DIM * jnp.dtype(out_dtype).itemsize
    )
    cost = pl.CostEstimate(
        flops=flops, transcendentals=padded, bytes_accessed=bytes_accessed)

    out = pl.pallas_call(
        _mlp_norm_kernel,
        out_shape=jax.ShapeDtypeStruct((padded, PROJ_DIM), out_dtype),
        grid=grid,
        in_specs=[
            pl.BlockSpec((tile, AUDIO_DIM), lambda i: (i, 0)),   # x tile (pipelined)
            _resident((AUDIO_DIM, H1)), _resident((1, H1)),
            _resident((H1, H2)),        _resident((1, H2)),
            _resident((H2, PROJ_DIM)),  _resident((1, PROJ_DIM)),
        ],
        out_specs=pl.BlockSpec((tile, PROJ_DIM), lambda i: (i, 0)),
        compiler_params=pltpu.CompilerParams(
            dimension_semantics=("parallel",),
            vmem_limit_bytes=32 * 1024 * 1024),
        cost_estimate=cost,
    )(x, w1, b1, w2, b2, w3, b3)

    return out if padded == n else out[:n]


def contrastive_net_forward(enc_a, enc_b, params, out_dtype=jnp.float32):
    """Fused forward: one pallas_call over the stacked (2B, 32) batch.

    NOTE: at large B, prefer calling _aud_proj_normalize directly on a
    pre-stacked, tile-aligned batch (and slicing lazily at the loss) so the
    wrapper concat + out[:B]/out[B:] copies of the (2B, 1024) result are
    avoided; at the small shapes used here they are negligible.
    """
    B = enc_a.shape[0]
    stacked = jnp.concatenate([enc_a, enc_b], axis=0).astype(jnp.float32)
    out = _aud_proj_normalize(stacked, params, out_dtype=out_dtype)
    return out[:B], out[B:]


def init_params(key):
    """Deterministic f32 init mirroring nn.Linear default (uniform +/- 1/sqrt(fan_in)).
    Weights are stored (in, out) so the kernel computes y = x @ W + b."""
    ks = jax.random.split(key, 6)

    def linear(kw, kb, fan_in, fan_out):
        bound = 1.0 / (fan_in ** 0.5)
        w = jax.random.uniform(kw, (fan_in, fan_out), jnp.float32, -bound, bound)
        b = jax.random.uniform(kb, (1, fan_out), jnp.float32, -bound, bound)
        return w, b

    w1, b1 = linear(ks[0], ks[1], AUDIO_DIM, H1)
    w2, b2 = linear(ks[2], ks[3], H1, H2)
    w3, b3 = linear(ks[4], ks[5], H2, PROJ_DIM)
    return (w1, b1, w2, b2, w3, b3)


def to_kernel_params(params):
    """bf16 weight storage (halves HBM weight traffic); biases stay f32."""
    w1, b1, w2, b2, w3, b3 = params
    return (w1.astype(jnp.bfloat16), b1,
            w2.astype(jnp.bfloat16), b2,
            w3.astype(jnp.bfloat16), b3)


def _reference_matched(enc_a, enc_b, kparams):
    """Pure-JAX reference replicating the kernel's compute path
    (bf16 weights/activations into the dots, f32 accumulation, rsqrt norm)."""
    w1, b1, w2, b2, w3, b3 = kparams

    def mlp(x):
        h = x.astype(jnp.bfloat16)
        h = jnp.maximum(jnp.dot(h, w1, preferred_element_type=jnp.float32) + b1, 0.0)
        h = jnp.maximum(jnp.dot(h.astype(jnp.bfloat16), w2,
                                preferred_element_type=jnp.float32) + b2, 0.0)
        o = jnp.dot(h.astype(jnp.bfloat16), w3,
                    preferred_element_type=jnp.float32) + b3
        sq = jnp.sum(o * o, axis=1, keepdims=True)
        return o * jax.lax.rsqrt(jnp.maximum(sq, 1e-24))

    return mlp(enc_a), mlp(enc_b)


def _reference_f32(enc_a, enc_b, params):
    """Full-f32 reference matching the original PyTorch module semantics."""
    w1, b1, w2, b2, w3, b3 = params

    def mlp(x):
        h = jnp.maximum(x @ w1 + b1, 0.0)
        h = jnp.maximum(h @ w2 + b2, 0.0)
        o = h @ w3 + b3
        nrm = jnp.maximum(jnp.sqrt(jnp.sum(o * o, axis=1, keepdims=True)), 1e-12)
        return o / nrm

    return mlp(enc_a), mlp(enc_b)


if __name__ == "__main__":
    key = jax.random.PRNGKey(0)
    k_p, k_a, k_b = jax.random.split(key, 3)

    params_f32 = init_params(k_p)
    kparams = to_kernel_params(params_f32)

    B = 8  # small batch -> single grid step, tile = 16 rows
    enc_a = jax.random.normal(k_a, (B, AUDIO_DIM), jnp.float32)
    enc_b = jax.random.normal(k_b, (B, AUDIO_DIM), jnp.float32)

    out1, out2 = contrastive_net_forward(enc_a, enc_b, kparams)
    out1 = jax.block_until_ready(out1)
    out2 = jax.block_until_ready(out2)
    assert out1.shape == (B, PROJ_DIM) and out2.shape == (B, PROJ_DIM)

    # Check against a pure-JAX reference on the kernel's bf16-weight compute path
    # (slightly loosened vs. before: accumulation order may differ from the MXU).
    r1, r2 = _reference_matched(enc_a, enc_b, kparams)
    assert jnp.allclose(out1, r1, atol=5e-4, rtol=1e-2)
    assert jnp.allclose(out2, r2, atol=5e-4, rtol=1e-2)

    # Looser check against full-f32 module semantics (bf16 storage only changes
    # low-order bits; outputs are unit-normalized so abs error is tiny).
    f1, f2 = _reference_f32(enc_a, enc_b, params_f32)
    assert jnp.allclose(out1, f1, atol=1e-2, rtol=5e-2)
    assert jnp.allclose(out2, f2, atol=1e-2, rtol=5e-2)

    print("KERNEL_OK")
</pallas_src>

<mosaic_0001>
module attributes {stable_mosaic.version = 11 : i64} {
  func.func @_mlp_norm_kernel(%arg0: i32, %arg1: memref<16x32xf32, #tpu.memory_space<vmem>>, %arg2: memref<32x256xbf16, #tpu.memory_space<vmem>>, %arg3: memref<1x256xf32, #tpu.memory_space<vmem>>, %arg4: memref<256x512xbf16, #tpu.memory_space<vmem>>, %arg5: memref<1x512xf32, #tpu.memory_space<vmem>>, %arg6: memref<512x1024xbf16, #tpu.memory_space<vmem>>, %arg7: memref<1x1024xf32, #tpu.memory_space<vmem>>, %arg8: memref<16x1024xf32, #tpu.memory_space<vmem>>) attributes {dimension_semantics = [#tpu.dimension_semantics<parallel>], iteration_bounds = array<i64: 1>, scalar_prefetch = 0 : i64, scratch_operands = 0 : i64, tpu.core_type = #tpu.core_type<tc>, window_params = [{transform_indices = @transform_0, window_bounds = array<i64: 16, 32>}, {pipeline_mode = #tpu.pipeline_mode<synchronous>, transform_indices = @transform_1, window_bounds = array<i64: 32, 256>}, {pipeline_mode = #tpu.pipeline_mode<synchronous>, transform_indices = @transform_2, window_bounds = array<i64: 1, 256>}, {pipeline_mode = #tpu.pipeline_mode<synchronous>, transform_indices = @transform_3, window_bounds = array<i64: 256, 512>}, {pipeline_mode = #tpu.pipeline_mode<synchronous>, transform_indices = @transform_4, window_bounds = array<i64: 1, 512>}, {pipeline_mode = #tpu.pipeline_mode<synchronous>, transform_indices = @transform_5, window_bounds = array<i64: 512, 1024>}, {pipeline_mode = #tpu.pipeline_mode<synchronous>, transform_indices = @transform_6, window_bounds = array<i64: 1, 1024>}, {transform_indices = @transform_7, window_bounds = array<i64: 16, 1024>}]} {
    %c0 = arith.constant 0 : index
    %c0_0 = arith.constant 0 : index
    %0 = vector.load %arg1[%c0, %c0_0] : memref<16x32xf32, #tpu.memory_space<vmem>>, vector<16x32xf32>
    %1 = arith.truncf %0 : vector<16x32xf32> to vector<16x32xbf16>
    %c0_1 = arith.constant 0 : index
    %c0_2 = arith.constant 0 : index
    %2 = vector.load %arg2[%c0_1, %c0_2] : memref<32x256xbf16, #tpu.memory_space<vmem>>, vector<32x256xbf16>
    %cst = arith.constant dense<0.000000e+00> : vector<16x256xf32>
    %3 = tpu.matmul %1, %2, %cst {dimension_numbers = #tpu.dot_dimension_numbers<[1], [0], [0], [1], [0, 0, 1, 1], [], []>} : vector<16x32xbf16>, vector<32x256xbf16>, vector<16x256xf32> -> vector<16x256xf32>
    %c0_3 = arith.constant 0 : index
    %c0_4 = arith.constant 0 : index
    %4 = vector.load %arg3[%c0_3, %c0_4] : memref<1x256xf32, #tpu.memory_space<vmem>>, vector<1x256xf32>
    %5 = vector.broadcast %4 : vector<1x256xf32> to vector<16x256xf32>
    %6 = arith.addf %3, %5 : vector<16x256xf32>
    %cst_5 = arith.constant 0.000000e+00 : f32
    %7 = vector.broadcast %cst_5 : f32 to vector<16x256xf32>
    %8 = arith.maximumf %6, %7 : vector<16x256xf32>
    %9 = arith.truncf %8 : vector<16x256xf32> to vector<16x256xbf16>
    %c0_6 = arith.constant 0 : index
    %c0_7 = arith.constant 0 : index
    %10 = vector.load %arg4[%c0_6, %c0_7] : memref<256x512xbf16, #tpu.memory_space<vmem>>, vector<256x512xbf16>
    %cst_8 = arith.constant dense<0.000000e+00> : vector<16x512xf32>
    %11 = tpu.matmul %9, %10, %cst_8 {dimension_numbers = #tpu.dot_dimension_numbers<[1], [0], [0], [1], [0, 0, 1, 1], [], []>} : vector<16x256xbf16>, vector<256x512xbf16>, vector<16x512xf32> -> vector<16x512xf32>
    %c0_9 = arith.constant 0 : index
    %c0_10 = arith.constant 0 : index
    %12 = vector.load %arg5[%c0_9, %c0_10] : memref<1x512xf32, #tpu.memory_space<vmem>>, vector<1x512xf32>
    %13 = vector.broadcast %12 : vector<1x512xf32> to vector<16x512xf32>
    %14 = arith.addf %11, %13 : vector<16x512xf32>
    %cst_11 = arith.constant 0.000000e+00 : f32
    %15 = vector.broadcast %cst_11 : f32 to vector<16x512xf32>
    %16 = arith.maximumf %14, %15 : vector<16x512xf32>
    %17 = arith.truncf %16 : vector<16x512xf32> to vector<16x512xbf16>
    %c0_12 = arith.constant 0 : index
    %c0_13 = arith.constant 0 : index
    %18 = vector.load %arg6[%c0_12, %c0_13] : memref<512x1024xbf16, #tpu.memory_space<vmem>>, vector<512x1024xbf16>
    %cst_14 = arith.constant dense<0.000000e+00> : vector<16x1024xf32>
    %19 = tpu.matmul %17, %18, %cst_14 {dimension_numbers = #tpu.dot_dimension_numbers<[1], [0], [0], [1], [0, 0, 1, 1], [], []>} : vector<16x512xbf16>, vector<512x1024xbf16>, vector<16x1024xf32> -> vector<16x1024xf32>
    %c0_15 = arith.constant 0 : index
    %c0_16 = arith.constant 0 : index
    %20 = vector.load %arg7[%c0_15, %c0_16] : memref<1x1024xf32, #tpu.memory_space<vmem>>, vector<1x1024xf32>
    %21 = vector.broadcast %20 : vector<1x1024xf32> to vector<16x1024xf32>
    %22 = arith.addf %19, %21 : vector<16x1024xf32>
    %23 = arith.mulf %22, %22 : vector<16x1024xf32>
    %cst_17 = arith.constant dense<0.000000e+00> : vector<16xf32>
    %24 = vector.multi_reduction <add>, %23, %cst_17 [1] : vector<16x1024xf32> to vector<16xf32>
    %25 = vector.shape_cast %24 : vector<16xf32> to vector<16x1xf32>
    %cst_18 = arith.constant 1.000000e-24 : f32
    %26 = vector.broadcast %cst_18 : f32 to vector<16x1xf32>
    %27 = arith.maximumf %25, %26 : vector<16x1xf32>
    %28 = math.rsqrt %27 : vector<16x1xf32>
    %29 = vector.broadcast %28 : vector<16x1xf32> to vector<16x1024xf32>
    %30 = arith.mulf %22, %29 : vector<16x1024xf32>
    %c0_19 = arith.constant 0 : index
    %c0_20 = arith.constant 0 : index
    %31 = vector.load %arg8[%c0_19, %c0_20] : memref<16x1024xf32, #tpu.memory_space<vmem>>, vector<16x1024xf32>
    tpu.vector_store %arg8[%c0_19, %c0_20], %30 {strides = array<i32>} : memref<16x1024xf32, #tpu.memory_space<vmem>>, vector<16x1024xf32>,
    return
  }
  func.func @transform_0(%arg0: i32) -> (i32, i32) {
    %c0_i32 = arith.constant 0 : i32
    %c0_i32_0 = arith.constant 0 : i32
    return %arg0, %c0_i32 : i32, i32
  }
  func.func @transform_1(%arg0: i32) -> (i32, i32) {
    %c0_i32 = arith.constant 0 : i32
    %c0_i32_0 = arith.constant 0 : i32
    %c0_i32_1 = arith.constant 0 : i32
    return %c0_i32, %c0_i32_0 : i32, i32
  }
  func.func @transform_2(%arg0: i32) -> (i32, i32) {
    %c0_i32 = arith.constant 0 : i32
    %c0_i32_0 = arith.constant 0 : i32
    %c0_i32_1 = arith.constant 0 : i32
    return %c0_i32, %c0_i32_0 : i32, i32
  }
  func.func @transform_3(%arg0: i32) -> (i32, i32) {
    %c0_i32 = arith.constant 0 : i32
    %c0_i32_0 = arith.constant 0 : i32
    %c0_i32_1 = arith.constant 0 : i32
    return %c0_i32, %c0_i32_0 : i32, i32
  }
  func.func @transform_4(%arg0: i32) -> (i32, i32) {
    %c0_i32 = arith.constant 0 : i32
    %c0_i32_0 = arith.constant 0 : i32
    %c0_i32_1 = arith.constant 0 : i32
    return %c0_i32, %c0_i32_0 : i32, i32
  }
  func.func @transform_5(%arg0: i32) -> (i32, i32) {
    %c0_i32 = arith.constant 0 : i32
    %c0_i32_0 = arith.constant 0 : i32
    %c0_i32_1 = arith.constant 0 : i32
    return %c0_i32, %c0_i32_0 : i32, i32
  }
  func.func @transform_6(%arg0: i32) -> (i32, i32) {
    %c0_i32 = arith.constant 0 : i32
    %c0_i32_0 = arith.constant 0 : i32
    %c0_i32_1 = arith.constant 0 : i32
    return %c0_i32, %c0_i32_0 : i32, i32
  }
  func.func @transform_7(%arg0: i32) -> (i32, i32) {
    %c0_i32 = arith.constant 0 : i32
    %c0_i32_0 = arith.constant 0 : i32
    return %arg0, %c0_i32 : i32, i32
  }
}

</mosaic_0001>

<llo_original>
// kernel: tpu_custom_call.1
$region0: #{tpu_custom_call.1}
  #allocation0 [shape = 'u32[]', space=smem, size = 0x4, offset = 0x4, fixed_abs, tag = 'smem constant byte address 0x4 - core index']
  #allocation1 [shape = 'u32[144,128]{1,0:T(1,128)}', space=vmem, size = 0x12000, scoped, tag = 'internal scratch']
  %s0 = inlined_call_operand.hbm [shape: f32[16,32], index: 0, kind: input, shape index: {}]
  %s1 = inlined_call_operand.hbm [shape: bf16[32,256], index: 1, kind: input, shape index: {}]
  %s2 = inlined_call_operand.vmem [shape: f32[1,256], index: 2, kind: input, shape index: {}]
  %s3 = inlined_call_operand.hbm [shape: bf16[256,512], index: 3, kind: input, shape index: {}]
  %s4 = inlined_call_operand.vmem [shape: f32[1,512], index: 4, kind: input, shape index: {}]
  %s5 = inlined_call_operand.hbm [shape: bf16[512,1024], index: 5, kind: input, shape index: {}]
  %s6 = inlined_call_operand.vmem [shape: f32[1,1024], index: 6, kind: input, shape index: {}]
  %s7 = inlined_call_operand.hbm [shape: f32[16,1024], index: 7, kind: output, shape index: {}]
  %s8 = sld [smem:[#allocation0]]
  $region54: #{tpu_custom_call.1} parent=0
    _
  %s10 = ssub.s32 1, %s8
  %s11 = scalar_select 0, %s10, %s8
  $region1: #{tpu_custom_call.1} parent=0
    #allocation2 [shape = 'u8[8192]{0}', space=vmem, size = 0x2000, scoped, tag = 'input window, operand 0, single buffered']
    #allocation3 [shape = 's32[1]{0}', space=sflag, size = 0x4, scoped, tag = 'scoped memory for tpu_custom_call.1']
    #allocation4 [shape = 's32[1]{0}', space=sflag, size = 0x4, scoped, tag = 'scoped memory for tpu_custom_call.1']
    #allocation5 [shape = 'u8[16384]{0}', space=vmem, size = 0x4000, scoped, tag = 'input window, operand 1, single buffered']
    #allocation6 [shape = 's32[1]{0}', space=sflag, size = 0x4, scoped, tag = 'scoped memory for tpu_custom_call.1']
    #allocation7 [shape = 'u8[262144]{0}', space=vmem, size = 0x40000, scoped, tag = 'input window, operand 3, single buffered']
    #allocation8 [shape = 'u8[1048576]{0}', space=vmem, size = 0x100000, scoped, tag = 'input window, operand 5, single buffered']
    #allocation9 [shape = 's32[1]{0}', space=sflag, size = 0x4, scoped, tag = 'scoped memory for tpu_custom_call.1']
    #allocation10 [shape = 'u8[65536]{0}', space=vmem, size = 0x10000, scoped, tag = 'output window, operand 0, single buffered']
    %12 = vsyncpa [#allocation3], 0
    %13 = vsyncpa [#allocation6], 0
    %14 = vsyncpa [#allocation9], 0
    %15 = vsyncpa [#allocation4], 0
    // Predicated region
    $region2: #{tpu_custom_call.1} parent=1 // pred_check
      _
    $region3: #{tpu_custom_call.1} parent=1 // pred_check_branch
      %17 = sbr.rel (0) target = $region5
    $region4: #{tpu_custom_call.1} parent=1 // pred_region
      %s19 = ssub.s32 256, 256
      %20 = vsyncadd [#allocation3], %s19
      %s21 = sshll.u32 [#allocation2], 4
      %s22 = int_to_ptr.vmem [resolvable:$true] %s21
      %27 = dma.hbm_to_vmem [thread:$0]  %s0, 256, %s22, [#allocation3], 128, 128, 8
    $region5: #{tpu_custom_call.1} parent=1 // pred_fallthru
      _
    // Predicated region
    $region6: #{tpu_custom_call.1} parent=1 // pred_check
      _
    $region7: #{tpu_custom_call.1} parent=1 // pred_check_branch
      %29 = sbr.rel (0) target = $region9
    $region8: #{tpu_custom_call.1} parent=1 // pred_region
      %s31 = ssub.s32 512, 512
      %32 = vsyncadd [#allocation6], %s31
      %s33 = sshll.u32 [#allocation5], 4
      %s34 = int_to_ptr.vmem [resolvable:$true] %s33
      %39 = dma.hbm_to_vmem [thread:$0]  %s1, 512, %s34, [#allocation6], 128, 128, 8
    $region9: #{tpu_custom_call.1} parent=1 // pred_fallthru
      _
    // Predicated region
    $region10: #{tpu_custom_call.1} parent=1 // pred_check
      _
    $region11: #{tpu_custom_call.1} parent=1 // pred_check_branch
      %41 = sbr.rel (0) target = $region13
    $region12: #{tpu_custom_call.1} parent=1 // pred_region
      _
    $region13: #{tpu_custom_call.1} parent=1 // pred_fallthru
      _
    // Predicated region
    $region14: #{tpu_custom_call.1} parent=1 // pred_check
      _
    $region15: #{tpu_custom_call.1} parent=1 // pred_check_branch
      %43 = sbr.rel (0) target = $region17
    $region16: #{tpu_custom_call.1} parent=1 // pred_region
      %s45 = ssub.s32 8192, 8192
      %46 = vsyncadd [#allocation6], %s45
      %s47 = sshll.u32 [#allocation7], 4
      %s48 = int_to_ptr.vmem [resolvable:$true] %s47
      %53 = dma.hbm_to_vmem [thread:$0]  %s3, 8192, %s48, [#allocation6], 256, 256, 16
    $region17: #{tpu_custom_call.1} parent=1 // pred_fallthru
      _
    // Predicated region
    $region18: #{tpu_custom_call.1} parent=1 // pred_check
      _
    $region19: #{tpu_custom_call.1} parent=1 // pred_check_branch
      %55 = sbr.rel (0) target = $region21
    $region20: #{tpu_custom_call.1} parent=1 // pred_region
      _
    $region21: #{tpu_custom_call.1} parent=1 // pred_fallthru
      _
    // Predicated region
    $region22: #{tpu_custom_call.1} parent=1 // pred_check
      _
    $region23: #{tpu_custom_call.1} parent=1 // pred_check_branch
      %57 = sbr.rel (0) target = $region25
    $region24: #{tpu_custom_call.1} parent=1 // pred_region
      %s59 = ssub.s32 32768, 32768
      %60 = vsyncadd [#allocation9], %s59
      %s61 = sshll.u32 [#allocation8], 4
      %s62 = int_to_ptr.vmem [resolvable:$true] %s61
      %67 = dma.hbm_to_vmem [thread:$0]  %s5, 32768, %s62, [#allocation9], 512, 512, 32
    $region25: #{tpu_custom_call.1} parent=1 // pred_fallthru
      _
    // Predicated region
    $region26: #{tpu_custom_call.1} parent=1 // pred_check
      _
    $region27: #{tpu_custom_call.1} parent=1 // pred_check_branch
      %69 = sbr.rel (0) target = $region29
    $region28: #{tpu_custom_call.1} parent=1 // pred_region
      _
    $region29: #{tpu_custom_call.1} parent=1 // pred_fallthru
      _
    // Predicated region
    $region30: #{tpu_custom_call.1} parent=1 // pred_check
      _
    $region31: #{tpu_custom_call.1} parent=1 // pred_check_branch
      %71 = sbr.rel (0) target = $region33
    $region32: #{tpu_custom_call.1} parent=1 // pred_region
      %72 = dma.done [#allocation3], 256
    $region33: #{tpu_custom_call.1} parent=1 // pred_fallthru
      _
    // Predicated region
    $region34: #{tpu_custom_call.1} parent=1 // pred_check
      _
    $region35: #{tpu_custom_call.1} parent=1 // pred_check_branch
      %74 = sbr.rel (0) target = $region37
    $region36: #{tpu_custom_call.1} parent=1 // pred_region
      %75 = dma.done [#allocation6], 512
    $region37: #{tpu_custom_call.1} parent=1 // pred_fallthru
      _
    // Predicated region
    $region38: #{tpu_custom_call.1} parent=1 // pred_check
      _
    $region39: #{tpu_custom_call.1} parent=1 // pred_check_branch
      %77 = sbr.rel (0) target = $region41
    $region40: #{tpu_custom_call.1} parent=1 // pred_region
      %78 = dma.done [#allocation6], 8192
    $region41: #{tpu_custom_call.1} parent=1 // pred_fallthru
      _
    // Predicated region
    $region42: #{tpu_custom_call.1} parent=1 // pred_check
      _
    $region43: #{tpu_custom_call.1} parent=1 // pred_check_branch
      %80 = sbr.rel (0) target = $region45
    $region44: #{tpu_custom_call.1} parent=1 // pred_region
      %81 = dma.done [#allocation9], 32768
    $region45: #{tpu_custom_call.1} parent=1 // pred_fallthru
      _
    %v83 = vld [vmem:[#allocation2] sm:$0xff]
    %v84 = vld [vmem:[#allocation2 + $0x8] sm:$0xff]
    %v85 = vpack.c.bf16 %v84, %v83
    %v86 = vld [vmem:[#allocation5] sm:$0xff]
    %v87 = vld [vmem:[#allocation5 + $0x8] sm:$0xff]
    %v88 = vld [vmem:[#allocation5 + $0x10] sm:$0xff]
    %v89 = vld [vmem:[#allocation5 + $0x18] sm:$0xff]
    %v90 = vld [vmem:[%s2] sm:$0x3]
    %v92 = vlaneseq
    %v93 = vshrl.u32 %v92, 7
    %v94 = vsub.s32 0, %v93
    %v95 = vrot.slane %v90, %v94
    %v96 = vlaneseq
    %v97 = vshrl.u32 %v96, 7
    %v98 = vsub.s32 1, %v97
    %v99 = vrot.slane %v90, %v98
    %v106 = vunpack.c.l.b16 %v86
    %v107 = vunpack.c.h.b16 %v86
    %v108 = vunpack.c.l.b16 %v87
    %v109 = vunpack.c.h.b16 %v87
    %v110 = vunpack.c.l.b16 %v88
    %v111 = vunpack.c.h.b16 %v88
    %v112 = vunpack.c.l.b16 %v89
    %v113 = vunpack.c.h.b16 %v89
    %v114 = vpack.c.b16 %v108, %v106
    %v115 = vpack.c.b16 %v109, %v107
    %v116 = vpack.c.b16 %v112, %v110
    %v117 = vpack.c.b16 %v113, %v111
    %vm122 = vcmask 261120
    %v124 = vsel %vm122, %v85, 0
    %126 = vmatprep.subr.bf16.mxu0 %v115
    %127 = vmatpush1.bf16.msra.mxu0 %v114
    %128 = vmatprep.subr.bf16.mxu0 %v117
    %129 = vmatpush1.bf16.msra.mxu0 %v116
    %130 = vmatprep.subr.bf16.mxu0 0
    %131 = vmatpush1.bf16.msra.mxu0 0
    %132 = vmatprep.subr.bf16.mxu0 0
    %133 = vmatpush1.bf16.msra.mxu0 0
    %134 = vmatprep.subr.bf16.mxu0 0
    %135 = vmatpush1.bf16.msra.mxu0 0
    %136 = vmatprep.subr.bf16.mxu0 0
    %137 = vmatpush1.bf16.msra.mxu0 0
    %138 = vmatprep.subr.bf16.mxu0 0
    %139 = vmatpush1.bf16.msra.mxu0 0
    %140 = vmatprep.subr.bf16.mxu0 0
    %141 = vmatpush1.bf16.msra.mxu0 0
    %142 = vmatprep.subr.bf16.mxu0 0
    %143 = vmatpush1.bf16.msra.mxu0 0
    %144 = vmatprep.subr.bf16.mxu0 0
    %145 = vmatpush1.bf16.msra.mxu0 0
    %146 = vmatprep.subr.bf16.mxu0 0
    %147 = vmatpush1.bf16.msra.mxu0 0
    %148 = vmatprep.subr.bf16.mxu0 0
    %149 = vmatpush1.bf16.msra.mxu0 0
    %150 = vmatprep.subr.bf16.mxu0 0
    %151 = vmatpush1.bf16.msra.mxu0 0
    %152 = vmatprep.subr.bf16.mxu0 0
    %153 = vmatpush1.bf16.msra.mxu0 0
    %154 = vmatprep.subr.bf16.mxu0 0
    %155 = vmatpush1.bf16.msra.mxu0 0
    %156 = vmatprep.subr.bf16.mxu0 0
    %157 = vmatpush1.bf16.msra.mxu0 0
    %158 = vmatprep.mubr.bf16.mxu0 0
    %159 = vmatmul.mubr.bf16.gmra.mrb[0].mxu0 %v124
    %v160 = vpop.f32.mrb[0].mxu0
    %v161 = vadd.f32 %v95, %v160
    %v162 = vpop.f32.mrb[0].mxu0
    %v163 = vadd.f32 %v99, %v162
    %v164 = vpop.f32.mrb[0].mxu0
    %v165 = vadd.f32 %v95, %v164
    %v166 = vpop.f32.mrb[0].mxu0
    %v167 = vadd.f32 %v99, %v166
    %168 = vdwg.mxu0
    %v169 = vmax.f32 %v161, 0.0
    %v170 = vmax.f32 %v163, 0.0
    %v171 = vmax.f32 %v165, 0.0
    %v172 = vmax.f32 %v167, 0.0
    %v173 = vpack.c.bf16 %v171, %v169
    %v174 = vpack.c.bf16 %v172, %v170
    %v175 = vld [vmem:[#allocation7] sm:$0xff]
    %v176 = vld [vmem:[#allocation7 + $0x8] sm:$0xff]
    %v177 = vld [vmem:[#allocation7 + $0x10] sm:$0xff]
    %v178 = vld [vmem:[#allocation7 + $0x18] sm:$0xff]
    %v179 = vld [vmem:[#allocation7 + $0x20] sm:$0xff]
    %v180 = vld [vmem:[#allocation7 + $0x28] sm:$0xff]
    %v181 = vld [vmem:[#allocation7 + $0x30] sm:$0xff]
    %v182 = vld [vmem:[#allocation7 + $0x38] sm:$0xff]
    %v183 = vld [vmem:[#allocation7 + $0x40] sm:$0xff]
    %v184 = vld [vmem:[#allocation7 + $0x48] sm:$0xff]
    %v185 = vld [vmem:[#allocation7 + $0x50] sm:$0xff]
    %v186 = vld [vmem:[#allocation7 + $0x58] sm:$0xff]
    %v187 = vld [vmem:[#allocation7 + $0x60] sm:$0xff]
    %v188 = vld [vmem:[#allocation7 + $0x68] sm:$0xff]
    %v189 = vld [vmem:[#allocation7 + $0x70] sm:$0xff]
    %v190 = vld [vmem:[#allocation7 + $0x78] sm:$0xff]
    %v191 = vld [vmem:[#allocation7 + $0x80] sm:$0xff]
    %v192 = vld [vmem:[#allocation7 + $0x88] sm:$0xff]
    %v193 = vld [vmem:[#allocation7 + $0x90] sm:$0xff]
    %v194 = vld [vmem:[#allocation7 + $0x98] sm:$0xff]
    %v195 = vld [vmem:[#allocation7 + $0xa0] sm:$0xff]
    %v196 = vld [vmem:[#allocation7 + $0xa8] sm:$0xff]
    %v197 = vld [vmem:[#allocation7 + $0xb0] sm:$0xff]
    %v198 = vld [vmem:[#allocation7 + $0xb8] sm:$0xff]
    %v199 = vld [vmem:[#allocation7 + $0xc0] sm:$0xff]
    %v200 = vld [vmem:[#allocation7 + $0xc8] sm:$0xff]
    %v201 = vld [vmem:[#allocation7 + $0xd0] sm:$0xff]
    %v202 = vld [vmem:[#allocation7 + $0xd8] sm:$0xff]
    %v203 = vld [vmem:[#allocation7 + $0xe0] sm:$0xff]
    %v204 = vld [vmem:[#allocation7 + $0xe8] sm:$0xff]
    %v205 = vld [vmem:[#allocation7 + $0xf0] sm:$0xff]
    %v206 = vld [vmem:[#allocation7 + $0xf8] sm:$0xff]
    %v207 = vld [vmem:[#allocation7 + $0x100] sm:$0xff]
    %v208 = vld [vmem:[#allocation7 + $0x108] sm:$0xff]
    %v209 = vld [vmem:[#allocation7 + $0x110] sm:$0xff]
    %v210 = vld [vmem:[#allocation7 + $0x118] sm:$0xff]
    %v211 = vld [vmem:[#allocation7 + $0x120] sm:$0xff]
    %v212 = vld [vmem:[#allocation7 + $0x128] sm:$0xff]
    %v213 = vld [vmem:[#allocation7 + $0x130] sm:$0xff]
    %v214 = vld [vmem:[#allocation7 + $0x138] sm:$0xff]
    %v215 = vld [vmem:[#allocation7 + $0x140] sm:$0xff]
    %v216 = vld [vmem:[#allocation7 + $0x148] sm:$0xff]
    %v217 = vld [vmem:[#allocation7 + $0x150] sm:$0xff]
    %v218 = vld [vmem:[#allocation7 + $0x158] sm:$0xff]
    %v219 = vld [vmem:[#allocation7 + $0x160] sm:$0xff]
    %v220 = vld [vmem:[#allocation7 + $0x168] sm:$0xff]
    %v221 = vld [vmem:[#allocation7 + $0x170] sm:$0xff]
    %v222 = vld [vmem:[#allocation7 + $0x178] sm:$0xff]
    %v223 = vld [vmem:[#allocation7 + $0x180] sm:$0xff]
    %v224 = vld [vmem:[#allocation7 + $0x188] sm:$0xff]
    %v225 = vld [vmem:[#allocation7 + $0x190] sm:$0xff]
    %v226 = vld [vmem:[#allocation7 + $0x198] sm:$0xff]
    %v227 = vld [vmem:[#allocation7 + $0x1a0] sm:$0xff]
    %v228 = vld [vmem:[#allocation7 + $0x1a8] sm:$0xff]
    %v229 = vld [vmem:[#allocation7 + $0x1b0] sm:$0xff]
    %v230 = vld [vmem:[#allocation7 + $0x1b8] sm:$0xff]
    %v231 = vld [vmem:[#allocation7 + $0x1c0] sm:$0xff]
    %v232 = vld [vmem:[#allocation7 + $0x1c8] sm:$0xff]
    %v233 = vld [vmem:[#allocation7 + $0x1d0] sm:$0xff]
    %v234 = vld [vmem:[#allocation7 + $0x1d8] sm:$0xff]
    %v235 = vld [vmem:[#allocation7 + $0x1e0] sm:$0xff]
    %v236 = vld [vmem:[#allocation7 + $0x1e8] sm:$0xff]
    %v237 = vld [vmem:[#allocation7 + $0x1f0] sm:$0xff]
    %v238 = vld [vmem:[#allocation7 + $0x1f8] sm:$0xff]
    %v239 = vld [vmem:[%s4] sm:$0xf]
    %v241 = vlaneseq
    %v242 = vshrl.u32 %v241, 7
    %v243 = vsub.s32 0, %v242
    %v244 = vrot.slane %v239, %v243
    %v245 = vlaneseq
    %v246 = vshrl.u32 %v245, 7
    %v247 = vsub.s32 1, %v246
    %v248 = vrot.slane %v239, %v247
    %v249 = vlaneseq
    %v250 = vshrl.u32 %v249, 7
    %v251 = vsub.s32 2, %v250
    %v252 = vrot.slane %v239, %v251
    %v253 = vlaneseq
    %v254 = vshrl.u32 %v253, 7
    %v255 = vsub.s32 3, %v254
    %v256 = vrot.slane %v239, %v255
    %v325 = vunpack.c.l.b16 %v175
    %v326 = vunpack.c.h.b16 %v175
    %v327 = vunpack.c.l.b16 %v176
    %v328 = vunpack.c.h.b16 %v176
    %v329 = vunpack.c.l.b16 %v177
    %v330 = vunpack.c.h.b16 %v177
    %v331 = vunpack.c.l.b16 %v178
    %v332 = vunpack.c.h.b16 %v178
    %v333 = vunpack.c.l.b16 %v179
    %v334 = vunpack.c.h.b16 %v179
    %v335 = vunpack.c.l.b16 %v180
    %v336 = vunpack.c.h.b16 %v180
    %v337 = vunpack.c.l.b16 %v181
    %v338 = vunpack.c.h.b16 %v181
    %v339 = vunpack.c.l.b16 %v182
    %v340 = vunpack.c.h.b16 %v182
    %v341 = vunpack.c.l.b16 %v183
    %v342 = vunpack.c.h.b16 %v183
    %v343 = vunpack.c.l.b16 %v184
    %v344 = vunpack.c.h.b16 %v184
    %v345 = vunpack.c.l.b16 %v185
    %v346 = vunpack.c.h.b16 %v185
    %v347 = vunpack.c.l.b16 %v186
    %v348 = vunpack.c.h.b16 %v186
    %v349 = vunpack.c.l.b16 %v187
    %v350 = vunpack.c.h.b16 %v187
    %v351 = vunpack.c.l.b16 %v188
    %v352 = vunpack.c.h.b16 %v188
    %v353 = vunpack.c.l.b16 %v189
    %v354 = vunpack.c.h.b16 %v189
    %v355 = vunpack.c.l.b16 %v190
    %v356 = vunpack.c.h.b16 %v190
    %v357 = vunpack.c.l.b16 %v191
    %v358 = vunpack.c.h.b16 %v191
    %v359 = vunpack.c.l.b16 %v192
    %v360 = vunpack.c.h.b16 %v192
    %v361 = vunpack.c.l.b16 %v193
    %v362 = vunpack.c.h.b16 %v193
    %v363 = vunpack.c.l.b16 %v194
    %v364 = vunpack.c.h.b16 %v194
    %v365 = vunpack.c.l.b16 %v195
    %v366 = vunpack.c.h.b16 %v195
    %v367 = vunpack.c.l.b16 %v196
    %v368 = vunpack.c.h.b16 %v196
    %v369 = vunpack.c.l.b16 %v197
    %v370 = vunpack.c.h.b16 %v197
    %v371 = vunpack.c.l.b16 %v198
    %v372 = vunpack.c.h.b16 %v198
    %v373 = vunpack.c.l.b16 %v199
    %v374 = vunpack.c.h.b16 %v199
    %v375 = vunpack.c.l.b16 %v200
    %v376 = vunpack.c.h.b16 %v200
    %v377 = vunpack.c.l.b16 %v201
    %v378 = vunpack.c.h.b16 %v201
    %v379 = vunpack.c.l.b16 %v202
    %v380 = vunpack.c.h.b16 %v202
    %v381 = vunpack.c.l.b16 %v203
    %v382 = vunpack.c.h.b16 %v203
    %v383 = vunpack.c.l.b16 %v204
    %v384 = vunpack.c.h.b16 %v204
    %v385 = vunpack.c.l.b16 %v205
    %v386 = vunpack.c.h.b16 %v205
    %v387 = vunpack.c.l.b16 %v206
    %v388 = vunpack.c.h.b16 %v206
    %v389 = vunpack.c.l.b16 %v207
    %v390 = vunpack.c.h.b16 %v207
    %v391 = vunpack.c.l.b16 %v208
    %v392 = vunpack.c.h.b16 %v208
    %v393 = vunpack.c.l.b16 %v209
    %v394 = vunpack.c.h.b16 %v209
    %v395 = vunpack.c.l.b16 %v210
    %v396 = vunpack.c.h.b16 %v210
    %v397 = vunpack.c.l.b16 %v211
    %v398 = vunpack.c.h.b16 %v211
    %v399 = vunpack.c.l.b16 %v212
    %v400 = vunpack.c.h.b16 %v212
    %v401 = vunpack.c.l.b16 %v213
    %v402 = vunpack.c.h.b16 %v213
    %v403 = vunpack.c.l.b16 %v214
    %v404 = vunpack.c.h.b16 %v214
    %v405 = vunpack.c.l.b16 %v215
    %v406 = vunpack.c.h.b16 %v215
    %v407 = vunpack.c.l.b16 %v216
    %v408 = vunpack.c.h.b16 %v216
    %v409 = vunpack.c.l.b16 %v217
    %v410 = vunpack.c.h.b16 %v217
    %v411 = vunpack.c.l.b16 %v218
    %v412 = vunpack.c.h.b16 %v218
    %v413 = vunpack.c.l.b16 %v219
    %v414 = vunpack.c.h.b16 %v219
    %v415 = vunpack.c.l.b16 %v220
    %v416 = vunpack.c.h.b16 %v220
    %v417 = vunpack.c.l.b16 %v221
    %v418 = vunpack.c.h.b16 %v221
    %v419 = vunpack.c.l.b16 %v222
    %v420 = vunpack.c.h.b16 %v222
    %v421 = vunpack.c.l.b16 %v223
    %v422 = vunpack.c.h.b16 %v223
    %v423 = vunpack.c.l.b16 %v224
    %v424 = vunpack.c.h.b16 %v224
    %v425 = vunpack.c.l.b16 %v225
    %v426 = vunpack.c.h.b16 %v225
    %v427 = vunpack.c.l.b16 %v226
    %v428 = vunpack.c.h.b16 %v226
    %v429 = vunpack.c.l.b16 %v227
    %v430 = vunpack.c.h.b16 %v227
    %v431 = vunpack.c.l.b16 %v228
    %v432 = vunpack.c.h.b16 %v228
    %v433 = vunpack.c.l.b16 %v229
    %v434 = vunpack.c.h.b16 %v229
    %v435 = vunpack.c.l.b16 %v230
    %v436 = vunpack.c.h.b16 %v230
    %v437 = vunpack.c.l.b16 %v231
    %v438 = vunpack.c.h.b16 %v231
    %v439 = vunpack.c.l.b16 %v232
    %v440 = vunpack.c.h.b16 %v232
    %v441 = vunpack.c.l.b16 %v233
    %v442 = vunpack.c.h.b16 %v233
    %v443 = vunpack.c.l.b16 %v234
    %v444 = vunpack.c.h.b16 %v234
    %v445 = vunpack.c.l.b16 %v235
    %v446 = vunpack.c.h.b16 %v235
    %v447 = vunpack.c.l.b16 %v236
    %v448 = vunpack.c.h.b16 %v236
    %v449 = vunpack.c.l.b16 %v237
    %v450 = vunpack.c.h.b16 %v237
    %v451 = vunpack.c.l.b16 %v238
    %v452 = vunpack.c.h.b16 %v238
    %v453 = vpack.c.b16 %v329, %v325
    %v454 = vpack.c.b16 %v330, %v326
    %v455 = vpack.c.b16 %v331, %v327
    %v456 = vpack.c.b16 %v332, %v328
    %v457 = vpack.c.b16 %v337, %v333
    %v458 = vpack.c.b16 %v338, %v334
    %v459 = vpack.c.b16 %v339, %v335
    %v460 = vpack.c.b16 %v340, %v336
    %v461 = vpack.c.b16 %v345, %v341
    %v462 = vpack.c.b16 %v346, %v342
    %v463 = vpack.c.b16 %v347, %v343
    %v464 = vpack.c.b16 %v348, %v344
    %v465 = vpack.c.b16 %v353, %v349
    %v466 = vpack.c.b16 %v354, %v350
    %v467 = vpack.c.b16 %v355, %v351
    %v468 = vpack.c.b16 %v356, %v352
    %v469 = vpack.c.b16 %v361, %v357
    %v470 = vpack.c.b16 %v362, %v358
    %v471 = vpack.c.b16 %v363, %v359
    %v472 = vpack.c.b16 %v364, %v360
    %v473 = vpack.c.b16 %v369, %v365
    %v474 = vpack.c.b16 %v370, %v366
    %v475 = vpack.c.b16 %v371, %v367
    %v476 = vpack.c.b16 %v372, %v368
    %v477 = vpack.c.b16 %v377, %v373
    %v478 = vpack.c.b16 %v378, %v374
    %v479 = vpack.c.b16 %v379, %v375
    %v480 = vpack.c.b16 %v380, %v376
    %v481 = vpack.c.b16 %v385, %v381
    %v482 = vpack.c.b16 %v386, %v382
    %v483 = vpack.c.b16 %v387, %v383
    %v484 = vpack.c.b16 %v388, %v384
    %v485 = vpack.c.b16 %v393, %v389
    %v486 = vpack.c.b16 %v394, %v390
    %v487 = vpack.c.b16 %v395, %v391
    %v488 = vpack.c.b16 %v396, %v392
    %v489 = vpack.c.b16 %v401, %v397
    %v490 = vpack.c.b16 %v402, %v398
    %v491 = vpack.c.b16 %v403, %v399
    %v492 = vpack.c.b16 %v404, %v400
    %v493 = vpack.c.b16 %v409, %v405
    %v494 = vpack.c.b16 %v410, %v406
    %v495 = vpack.c.b16 %v411, %v407
    %v496 = vpack.c.b16 %v412, %v408
    %v497 = vpack.c.b16 %v417, %v413
    %v498 = vpack.c.b16 %v418, %v414
    %v499 = vpack.c.b16 %v419, %v415
    %v500 = vpack.c.b16 %v420, %v416
    %v501 = vpack.c.b16 %v425, %v421
    %v502 = vpack.c.b16 %v426, %v422
    %v503 = vpack.c.b16 %v427, %v423
    %v504 = vpack.c.b16 %v428, %v424
    %v505 = vpack.c.b16 %v433, %v429
    %v506 = vpack.c.b16 %v434, %v430
    %v507 = vpack.c.b16 %v435, %v431
    %v508 = vpack.c.b16 %v436, %v432
    %v509 = vpack.c.b16 %v441, %v437
    %v510 = vpack.c.b16 %v442, %v438
    %v511 = vpack.c.b16 %v443, %v439
    %v512 = vpack.c.b16 %v444, %v440
    %v513 = vpack.c.b16 %v449, %v445
    %v514 = vpack.c.b16 %v450, %v446
    %v515 = vpack.c.b16 %v451, %v447
    %v516 = vpack.c.b16 %v452, %v448
    %581 = vmatprep.subr.bf16.mxu0 %v454
    %582 = vmatpush1.bf16.msra.mxu0 %v453
    %583 = vmatprep.subr.bf16.mxu0 %v458
    %584 = vmatpush1.bf16.msra.mxu0 %v457
    %585 = vmatprep.subr.bf16.mxu0 %v462
    %586 = vmatpush1.bf16.msra.mxu0 %v461
    %587 = vmatprep.subr.bf16.mxu0 %v466
    %588 = vmatpush1.bf16.msra.mxu0 %v465
    %589 = vmatprep.subr.bf16.mxu0 %v470
    %590 = vmatpush1.bf16.msra.mxu0 %v469
    %591 = vmatprep.subr.bf16.mxu0 %v474
    %592 = vmatpush1.bf16.msra.mxu0 %v473
    %593 = vmatprep.subr.bf16.mxu0 %v478
    %594 = vmatpush1.bf16.msra.mxu0 %v477
    %595 = vmatprep.subr.bf16.mxu0 %v482
    %596 = vmatpush1.bf16.msra.mxu0 %v481
    %597 = vmatprep.subr.bf16.mxu0 %v486
    %598 = vmatpush1.bf16.msra.mxu0 %v485
    %599 = vmatprep.subr.bf16.mxu0 %v490
    %600 = vmatpush1.bf16.msra.mxu0 %v489
    %601 = vmatprep.subr.bf16.mxu0 %v494
    %602 = vmatpush1.bf16.msra.mxu0 %v493
    %603 = vmatprep.subr.bf16.mxu0 %v498
    %604 = vmatpush1.bf16.msra.mxu0 %v497
    %605 = vmatprep.subr.bf16.mxu0 %v502
    %606 = vmatpush1.bf16.msra.mxu0 %v501
    %607 = vmatprep.subr.bf16.mxu0 %v506
    %608 = vmatpush1.bf16.msra.mxu0 %v505
    %609 = vmatprep.subr.bf16.mxu0 %v510
    %610 = vmatpush1.bf16.msra.mxu0 %v509
    %611 = vmatprep.subr.bf16.mxu0 %v514
    %612 = vmatpush1.bf16.msra.mxu0 %v513
    %613 = vmatprep.mubr.bf16.mxu0 %v174
    %614 = vmatmul.mubr.bf16.gmra.mrb[0].mxu0 %v173
    %v615 = vpop.f32.mrb[0].mxu0
    %v616 = vadd.f32 %v244, %v615
    %v617 = vpop.f32.mrb[0].mxu0
    %v618 = vadd.f32 %v248, %v617
    %v619 = vpop.f32.mrb[0].mxu0
    %v620 = vadd.f32 %v244, %v619
    %v621 = vpop.f32.mrb[0].mxu0
    %v622 = vadd.f32 %v248, %v621
    %623 = vdwg.mxu0
    %624 = vmatprep.subr.bf16.mxu0 %v456
    %625 = vmatpush1.bf16.msra.mxu0 %v455
    %626 = vmatprep.subr.bf16.mxu0 %v460
    %627 = vmatpush1.bf16.msra.mxu0 %v459
    %628 = vmatprep.subr.bf16.mxu0 %v464
    %629 = vmatpush1.bf16.msra.mxu0 %v463
    %630 = vmatprep.subr.bf16.mxu0 %v468
    %631 = vmatpush1.bf16.msra.mxu0 %v467
    %632 = vmatprep.subr.bf16.mxu0 %v472
    %633 = vmatpush1.bf16.msra.mxu0 %v471
    %634 = vmatprep.subr.bf16.mxu0 %v476
    %635 = vmatpush1.bf16.msra.mxu0 %v475
    %636 = vmatprep.subr.bf16.mxu0 %v480
    %637 = vmatpush1.bf16.msra.mxu0 %v479
    %638 = vmatprep.subr.bf16.mxu0 %v484
    %639 = vmatpush1.bf16.msra.mxu0 %v483
    %640 = vmatprep.subr.bf16.mxu0 %v488
    %641 = vmatpush1.bf16.msra.mxu0 %v487
    %642 = vmatprep.subr.bf16.mxu0 %v492
    %643 = vmatpush1.bf16.msra.mxu0 %v491
    %644 = vmatprep.subr.bf16.mxu0 %v496
    %645 = vmatpush1.bf16.msra.mxu0 %v495
    %646 = vmatprep.subr.bf16.mxu0 %v500
    %647 = vmatpush1.bf16.msra.mxu0 %v499
    %648 = vmatprep.subr.bf16.mxu0 %v504
    %649 = vmatpush1.bf16.msra.mxu0 %v503
    %650 = vmatprep.subr.bf16.mxu0 %v508
    %651 = vmatpush1.bf16.msra.mxu0 %v507
    %652 = vmatprep.subr.bf16.mxu0 %v512
    %653 = vmatpush1.bf16.msra.mxu0 %v511
    %654 = vmatprep.subr.bf16.mxu0 %v516
    %655 = vmatpush1.bf16.msra.mxu0 %v515
    %656 = vmatprep.mubr.bf16.mxu0 %v174
    %657 = vmatmul.mubr.bf16.gmra.mrb[0].mxu0 %v173
    %v658 = vpop.f32.mrb[0].mxu0
    %v659 = vadd.f32 %v252, %v658
    %v660 = vpop.f32.mrb[0].mxu0
    %v661 = vadd.f32 %v256, %v660
    %v662 = vpop.f32.mrb[0].mxu0
    %v663 = vadd.f32 %v252, %v662
    %v664 = vpop.f32.mrb[0].mxu0
    %v665 = vadd.f32 %v256, %v664
    %666 = vdwg.mxu0
    %v667 = vmax.f32 %v616, 0.0
    %v668 = vmax.f32 %v618, 0.0
    %v669 = vmax.f32 %v659, 0.0
    %v670 = vmax.f32 %v661, 0.0
    %v671 = vmax.f32 %v620, 0.0
    %v672 = vmax.f32 %v622, 0.0
    %v673 = vmax.f32 %v663, 0.0
    %v674 = vmax.f32 %v665, 0.0
    %v675 = vpack.c.bf16 %v671, %v667
    %v676 = vpack.c.bf16 %v672, %v668
    %v677 = vpack.c.bf16 %v673, %v669
    %v678 = vpack.c.bf16 %v674, %v670
    %v679 = vld [vmem:[#allocation8] sm:$0xff]
    %v680 = vld [vmem:[#allocation8 + $0x8] sm:$0xff]
    %v681 = vld [vmem:[#allocation8 + $0x10] sm:$0xff]
    %v682 = vld [vmem:[#allocation8 + $0x18] sm:$0xff]
    %v683 = vld [vmem:[#allocation8 + $0x20] sm:$0xff]
    %v684 = vld [vmem:[#allocation8 + $0x28] sm:$0xff]
    %v685 = vld [vmem:[#allocation8 + $0x30] sm:$0xff]
    %v686 = vld [vmem:[#allocation8 + $0x38] sm:$0xff]
    %v687 = vld [vmem:[#allocation8 + $0x40] sm:$0xff]
    %v688 = vld [vmem:[#allocation8 + $0x48] sm:$0xff]
    %v689 = vld [vmem:[#allocation8 + $0x50] sm:$0xff]
    %v690 = vld [vmem:[#allocation8 + $0x58] sm:$0xff]
    %v691 = vld [vmem:[#allocation8 + $0x60] sm:$0xff]
    %v692 = vld [vmem:[#allocation8 + $0x68] sm:$0xff]
    %v693 = vld [vmem:[#allocation8 + $0x70] sm:$0xff]
    %v694 = vld [vmem:[#allocation8 + $0x78] sm:$0xff]
    %v695 = vld [vmem:[#allocation8 + $0x80] sm:$0xff]
    %v696 = vld [vmem:[#allocation8 + $0x88] sm:$0xff]
    %v697 = vld [vmem:[#allocation8 + $0x90] sm:$0xff]
    %v698 = vld [vmem:[#allocation8 + $0x98] sm:$0xff]
    %v699 = vld [vmem:[#allocation8 + $0xa0] sm:$0xff]
    %v700 = vld [vmem:[#allocation8 + $0xa8] sm:$0xff]
    %v701 = vld [vmem:[#allocation8 + $0xb0] sm:$0xff]
    %v702 = vld [vmem:[#allocation8 + $0xb8] sm:$0xff]
    %v703 = vld [vmem:[#allocation8 + $0xc0] sm:$0xff]
    %v704 = vld [vmem:[#allocation8 + $0xc8] sm:$0xff]
    %v705 = vld [vmem:[#allocation8 + $0xd0] sm:$0xff]
    %v706 = vld [vmem:[#allocation8 + $0xd8] sm:$0xff]
    %v707 = vld [vmem:[#allocation8 + $0xe0] sm:$0xff]
    %v708 = vld [vmem:[#allocation8 + $0xe8] sm:$0xff]
    %v709 = vld [vmem:[#allocation8 + $0xf0] sm:$0xff]
    %v710 = vld [vmem:[#allocation8 + $0xf8] sm:$0xff]
    %v711 = vld [vmem:[#allocation8 + $0x100] sm:$0xff]
    %v712 = vld [vmem:[#allocation8 + $0x108] sm:$0xff]
    %v713 = vld [vmem:[#allocation8 + $0x110] sm:$0xff]
    %v714 = vld [vmem:[#allocation8 + $0x118] sm:$0xff]
    %v715 = vld [vmem:[#allocation8 + $0x120] sm:$0xff]
    %v716 = vld [vmem:[#allocation8 + $0x128] sm:$0xff]
    %v717 = vld [vmem:[#allocation8 + $0x130] sm:$0xff]
    %v718 = vld [vmem:[#allocation8 + $0x138] sm:$0xff]
    %v719 = vld [vmem:[#allocation8 + $0x140] sm:$0xff]
    %v720 = vld [vmem:[#allocation8 + $0x148] sm:$0xff]
    %v721 = vld [vmem:[#allocation8 + $0x150] sm:$0xff]
    %v722 = vld [vmem:[#allocation8 + $0x158] sm:$0xff]
    %v723 = vld [vmem:[#allocation8 + $0x160] sm:$0xff]
    %v724 = vld [vmem:[#allocation8 + $0x168] sm:$0xff]
    %v725 = vld [vmem:[#allocation8 + $0x170] sm:$0xff]
    %v726 = vld [vmem:[#allocation8 + $0x178] sm:$0xff]
    %v727 = vld [vmem:[#allocation8 + $0x180] sm:$0xff]
    %v728 = vld [vmem:[#allocation8 + $0x188] sm:$0xff]
    %v729 = vld [vmem:[#allocation8 + $0x190] sm:$0xff]
    %v730 = vld [vmem:[#allocation8 + $0x198] sm:$0xff]
    %v731 = vld [vmem:[#allocation8 + $0x1a0] sm:$0xff]
    %v732 = vld [vmem:[#allocation8 + $0x1a8] sm:$0xff]
    %v733 = vld [vmem:[#allocation8 + $0x1b0] sm:$0xff]
    %v734 = vld [vmem:[#allocation8 + $0x1b8] sm:$0xff]
    %v735 = vld [vmem:[#allocation8 + $0x1c0] sm:$0xff]
    %v736 = vld [vmem:[#allocation8 + $0x1c8] sm:$0xff]
    %v737 = vld [vmem:[#allocation8 + $0x1d0] sm:$0xff]
    %v738 = vld [vmem:[#allocation8 + $0x1d8] sm:$0xff]
    %v739 = vld [vmem:[#allocation8 + $0x1e0] sm:$0xff]
    %v740 = vld [vmem:[#allocation8 + $0x1e8] sm:$0xff]
    %v741 = vld [vmem:[#allocation8 + $0x1f0] sm:$0xff]
    %v742 = vld [vmem:[#allocation8 + $0x1f8] sm:$0xff]
    %v743 = vld [vmem:[#allocation8 + $0x200] sm:$0xff]
    %v744 = vld [vmem:[#allocation8 + $0x208] sm:$0xff]
    %v745 = vld [vmem:[#allocation8 + $0x210] sm:$0xff]
    %v746 = vld [vmem:[#allocation8 + $0x218] sm:$0xff]
    %v747 = vld [vmem:[#allocation8 + $0x220] sm:$0xff]
    %v748 = vld [vmem:[#allocation8 + $0x228] sm:$0xff]
    %v749 = vld [vmem:[#allocation8 + $0x230] sm:$0xff]
    %v750 = vld [vmem:[#allocation8 + $0x238] sm:$0xff]
    %v751 = vld [vmem:[#allocation8 + $0x240] sm:$0xff]
    %v752 = vld [vmem:[#allocation8 + $0x248] sm:$0xff]
    %v753 = vld [vmem:[#allocation8 + $0x250] sm:$0xff]
    %v754 = vld [vmem:[#allocation8 + $0x258] sm:$0xff]
    %v755 = vld [vmem:[#allocation8 + $0x260] sm:$0xff]
    %v756 = vld [vmem:[#allocation8 + $0x268] sm:$0xff]
    %v757 = vld [vmem:[#allocation8 + $0x270] sm:$0xff]
    %v758 = vld [vmem:[#allocation8 + $0x278] sm:$0xff]
    %v759 = vld [vmem:[#allocation8 + $0x280] sm:$0xff]
    %v760 = vld [vmem:[#allocation8 + $0x288] sm:$0xff]
    %v761 = vld [vmem:[#allocation8 + $0x290] sm:$0xff]
    %v762 = vld [vmem:[#allocation8 + $0x298] sm:$0xff]
    %v763 = vld [vmem:[#allocation8 + $0x2a0] sm:$0xff]
    %v764 = vld [vmem:[#allocation8 + $0x2a8] sm:$0xff]
    %v765 = vld [vmem:[#allocation8 + $0x2b0] sm:$0xff]
    %v766 = vld [vmem:[#allocation8 + $0x2b8] sm:$0xff]
    %v767 = vld [vmem:[#allocation8 + $0x2c0] sm:$0xff]
    %v768 = vld [vmem:[#allocation8 + $0x2c8] sm:$0xff]
    %v769 = vld [vmem:[#allocation8 + $0x2d0] sm:$0xff]
    %v770 = vld [vmem:[#allocation8 + $0x2d8] sm:$0xff]
    %v771 = vld [vmem:[#allocation8 + $0x2e0] sm:$0xff]
    %v772 = vld [vmem:[#allocation8 + $0x2e8] sm:$0xff]
    %v773 = vld [vmem:[#allocation8 + $0x2f0] sm:$0xff]
    %v774 = vld [vmem:[#allocation8 + $0x2f8] sm:$0xff]
    %v775 = vld [vmem:[#allocation8 + $0x300] sm:$0xff]
    %v776 = vld [vmem:[#allocation8 + $0x308] sm:$0xff]
    %v777 = vld [vmem:[#allocation8 + $0x310] sm:$0xff]
    %v778 = vld [vmem:[#allocation8 + $0x318] sm:$0xff]
    %v779 = vld [vmem:[#allocation8 + $0x320] sm:$0xff]
    %v780 = vld [vmem:[#allocation8 + $0x328] sm:$0xff]
    %v781 = vld [vmem:[#allocation8 + $0x330] sm:$0xff]
    %v782 = vld [vmem:[#allocation8 + $0x338] sm:$0xff]
    %v783 = vld [vmem:[#allocation8 + $0x340] sm:$0xff]
    %v784 = vld [vmem:[#allocation8 + $0x348] sm:$0xff]
    %v785 = vld [vmem:[#allocation8 + $0x350] sm:$0xff]
    %v786 = vld [vmem:[#allocation8 + $0x358] sm:$0xff]
    %v787 = vld [vmem:[#allocation8 + $0x360] sm:$0xff]
    %v788 = vld [vmem:[#allocation8 + $0x368] sm:$0xff]
    %v789 = vld [vmem:[#allocation8 + $0x370] sm:$0xff]
    %v790 = vld [vmem:[#allocation8 + $0x378] sm:$0xff]
    %v791 = vld [vmem:[#allocation8 + $0x380] sm:$0xff]
    %v792 = vld [vmem:[#allocation8 + $0x388] sm:$0xff]
    %v793 = vld [vmem:[#allocation8 + $0x390] sm:$0xff]
    %v794 = vld [vmem:[#allocation8 + $0x398] sm:$0xff]
    %v795 = vld [vmem:[#allocation8 + $0x3a0] sm:$0xff]
    %v796 = vld [vmem:[#allocation8 + $0x3a8] sm:$0xff]
    %v797 = vld [vmem:[#allocation8 + $0x3b0] sm:$0xff]
    %v798 = vld [vmem:[#allocation8 + $0x3b8] sm:$0xff]
    %v799 = vld [vmem:[#allocation8 + $0x3c0] sm:$0xff]
    %v800 = vld [vmem:[#allocation8 + $0x3c8] sm:$0xff]
    %v801 = vld [vmem:[#allocation8 + $0x3d0] sm:$0xff]
    %v802 = vld [vmem:[#allocation8 + $0x3d8] sm:$0xff]
    %v803 = vld [vmem:[#allocation8 + $0x3e0] sm:$0xff]
    %v804 = vld [vmem:[#allocation8 + $0x3e8] sm:$0xff]
    %v805 = vld [vmem:[#allocation8 + $0x3f0] sm:$0xff]
    %v806 = vld [vmem:[#allocation8 + $0x3f8] sm:$0xff]
    %v807 = vld [vmem:[#allocation8 + $0x400] sm:$0xff]
    %v808 = vld [vmem:[#allocation8 + $0x408] sm:$0xff]
    %v809 = vld [vmem:[#allocation8 + $0x410] sm:$0xff]
    %v810 = vld [vmem:[#allocation8 + $0x418] sm:$0xff]
    %v811 = vld [vmem:[#allocation8 + $0x420] sm:$0xff]
    %v812 = vld [vmem:[#allocation8 + $0x428] sm:$0xff]
    %v813 = vld [vmem:[#allocation8 + $0x430] sm:$0xff]
    %v814 = vld [vmem:[#allocation8 + $0x438] sm:$0xff]
    %v815 = vld [vmem:[#allocation8 + $0x440] sm:$0xff]
    %v816 = vld [vmem:[#allocation8 + $0x448] sm:$0xff]
    %v817 = vld [vmem:[#allocation8 + $0x450] sm:$0xff]
    %v818 = vld [vmem:[#allocation8 + $0x458] sm:$0xff]
    %v819 = vld [vmem:[#allocation8 + $0x460] sm:$0xff]
    %v820 = vld [vmem:[#allocation8 + $0x468] sm:$0xff]
    %v821 = vld [vmem:[#allocation8 + $0x470] sm:$0xff]
    %v822 = vld [vmem:[#allocation8 + $0x478] sm:$0xff]
    %v823 = vld [vmem:[#allocation8 + $0x480] sm:$0xff]
    %v824 = vld [vmem:[#allocation8 + $0x488] sm:$0xff]
    %v825 = vld [vmem:[#allocation8 + $0x490] sm:$0xff]
    %v826 = vld [vmem:[#allocation8 + $0x498] sm:$0xff]
    %v827 = vld [vmem:[#allocation8 + $0x4a0] sm:$0xff]
    %v828 = vld [vmem:[#allocation8 + $0x4a8] sm:$0xff]
    %v829 = vld [vmem:[#allocation8 + $0x4b0] sm:$0xff]
    %v830 = vld [vmem:[#allocation8 + $0x4b8] sm:$0xff]
    %v831 = vld [vmem:[#allocation8 + $0x4c0] sm:$0xff]
    %v832 = vld [vmem:[#allocation8 + $0x4c8] sm:$0xff]
    %v833 = vld [vmem:[#allocation8 + $0x4d0] sm:$0xff]
    %v834 = vld [vmem:[#allocation8 + $0x4d8] sm:$0xff]
    %v835 = vld [vmem:[#allocation8 + $0x4e0] sm:$0xff]
    %v836 = vld [vmem:[#allocation8 + $0x4e8] sm:$0xff]
    %v837 = vld [vmem:[#allocation8 + $0x4f0] sm:$0xff]
    %v838 = vld [vmem:[#allocation8 + $0x4f8] sm:$0xff]
    %v839 = vld [vmem:[#allocation8 + $0x500] sm:$0xff]
    %v840 = vld [vmem:[#allocation8 + $0x508] sm:$0xff]
    %v841 = vld [vmem:[#allocation8 + $0x510] sm:$0xff]
    %v842 = vld [vmem:[#allocation8 + $0x518] sm:$0xff]
    %v843 = vld [vmem:[#allocation8 + $0x520] sm:$0xff]
    %v844 = vld [vmem:[#allocation8 + $0x528] sm:$0xff]
    %v845 = vld [vmem:[#allocation8 + $0x530] sm:$0xff]
    %v846 = vld [vmem:[#allocation8 + $0x538] sm:$0xff]
    %v847 = vld [vmem:[#allocation8 + $0x540] sm:$0xff]
    %v848 = vld [vmem:[#allocation8 + $0x548] sm:$0xff]
    %v849 = vld [vmem:[#allocation8 + $0x550] sm:$0xff]
    %v850 = vld [vmem:[#allocation8 + $0x558] sm:$0xff]
    %v851 = vld [vmem:[#allocation8 + $0x560] sm:$0xff]
    %v852 = vld [vmem:[#allocation8 + $0x568] sm:$0xff]
    %v853 = vld [vmem:[#allocation8 + $0x570] sm:$0xff]
    %v854 = vld [vmem:[#allocation8 + $0x578] sm:$0xff]
    %v855 = vld [vmem:[#allocation8 + $0x580] sm:$0xff]
    %v856 = vld [vmem:[#allocation8 + $0x588] sm:$0xff]
    %v857 = vld [vmem:[#allocation8 + $0x590] sm:$0xff]
    %v858 = vld [vmem:[#allocation8 + $0x598] sm:$0xff]
    %v859 = vld [vmem:[#allocation8 + $0x5a0] sm:$0xff]
    %v860 = vld [vmem:[#allocation8 + $0x5a8] sm:$0xff]
    %v861 = vld [vmem:[#allocation8 + $0x5b0] sm:$0xff]
    %v862 = vld [vmem:[#allocation8 + $0x5b8] sm:$0xff]
    %v863 = vld [vmem:[#allocation8 + $0x5c0] sm:$0xff]
    %v864 = vld [vmem:[#allocation8 + $0x5c8] sm:$0xff]
    %v865 = vld [vmem:[#allocation8 + $0x5d0] sm:$0xff]
    %v866 = vld [vmem:[#allocation8 + $0x5d8] sm:$0xff]
    %v867 = vld [vmem:[#allocation8 + $0x5e0] sm:$0xff]
    %v868 = vld [vmem:[#allocation8 + $0x5e8] sm:$0xff]
    %v869 = vld [vmem:[#allocation8 + $0x5f0] sm:$0xff]
    %v870 = vld [vmem:[#allocation8 + $0x5f8] sm:$0xff]
    %v871 = vld [vmem:[#allocation8 + $0x600] sm:$0xff]
    %v872 = vld [vmem:[#allocation8 + $0x608] sm:$0xff]
    %v873 = vld [vmem:[#allocation8 + $0x610] sm:$0xff]
    %v874 = vld [vmem:[#allocation8 + $0x618] sm:$0xff]
    %v875 = vld [vmem:[#allocation8 + $0x620] sm:$0xff]
    %v876 = vld [vmem:[#allocation8 + $0x628] sm:$0xff]
    %v877 = vld [vmem:[#allocation8 + $0x630] sm:$0xff]
    %v878 = vld [vmem:[#allocation8 + $0x638] sm:$0xff]
    %v879 = vld [vmem:[#allocation8 + $0x640] sm:$0xff]
    %v880 = vld [vmem:[#allocation8 + $0x648] sm:$0xff]
    %v881 = vld [vmem:[#allocation8 + $0x650] sm:$0xff]
    %v882 = vld [vmem:[#allocation8 + $0x658] sm:$0xff]
    %v883 = vld [vmem:[#allocation8 + $0x660] sm:$0xff]
    %v884 = vld [vmem:[#allocation8 + $0x668] sm:$0xff]
    %v885 = vld [vmem:[#allocation8 + $0x670] sm:$0xff]
    %v886 = vld [vmem:[#allocation8 + $0x678] sm:$0xff]
    %v887 = vld [vmem:[#allocation8 + $0x680] sm:$0xff]
    %v888 = vld [vmem:[#allocation8 + $0x688] sm:$0xff]
    %v889 = vld [vmem:[#allocation8 + $0x690] sm:$0xff]
    %v890 = vld [vmem:[#allocation8 + $0x698] sm:$0xff]
    %v891 = vld [vmem:[#allocation8 + $0x6a0] sm:$0xff]
    %v892 = vld [vmem:[#allocation8 + $0x6a8] sm:$0xff]
    %v893 = vld [vmem:[#allocation8 + $0x6b0] sm:$0xff]
    %v894 = vld [vmem:[#allocation8 + $0x6b8] sm:$0xff]
    %v895 = vld [vmem:[#allocation8 + $0x6c0] sm:$0xff]
    %v896 = vld [vmem:[#allocation8 + $0x6c8] sm:$0xff]
    %v897 = vld [vmem:[#allocation8 + $0x6d0] sm:$0xff]
    %v898 = vld [vmem:[#allocation8 + $0x6d8] sm:$0xff]
    %v899 = vld [vmem:[#allocation8 + $0x6e0] sm:$0xff]
    %v900 = vld [vmem:[#allocation8 + $0x6e8] sm:$0xff]
    %v901 = vld [vmem:[#allocation8 + $0x6f0] sm:$0xff]
    %v902 = vld [vmem:[#allocation8 + $0x6f8] sm:$0xff]
    %v903 = vld [vmem:[#allocation8 + $0x700] sm:$0xff]
    %v904 = vld [vmem:[#allocation8 + $0x708] sm:$0xff]
    %v905 = vld [vmem:[#allocation8 + $0x710] sm:$0xff]
    %v906 = vld [vmem:[#allocation8 + $0x718] sm:$0xff]
    %v907 = vld [vmem:[#allocation8 + $0x720] sm:$0xff]
    %v908 = vld [vmem:[#allocation8 + $0x728] sm:$0xff]
    %v909 = vld [vmem:[#allocation8 + $0x730] sm:$0xff]
    %v910 = vld [vmem:[#allocation8 + $0x738] sm:$0xff]
    %v911 = vld [vmem:[#allocation8 + $0x740] sm:$0xff]
    %v912 = vld [vmem:[#allocation8 + $0x748] sm:$0xff]
    %v913 = vld [vmem:[#allocation8 + $0x750] sm:$0xff]
    %v914 = vld [vmem:[#allocation8 + $0x758] sm:$0xff]
    %v915 = vld [vmem:[#allocation8 + $0x760] sm:$0xff]
    %v916 = vld [vmem:[#allocation8 + $0x768] sm:$0xff]
    %v917 = vld [vmem:[#allocation8 + $0x770] sm:$0xff]
    %v918 = vld [vmem:[#allocation8 + $0x778] sm:$0xff]
    %v919 = vld [vmem:[#allocation8 + $0x780] sm:$0xff]
    %v920 = vld [vmem:[#allocation8 + $0x788] sm:$0xff]
    %v921 = vld [vmem:[#allocation8 + $0x790] sm:$0xff]
    %v922 = vld [vmem:[#allocation8 + $0x798] sm:$0xff]
    %v923 = vld [vmem:[#allocation8 + $0x7a0] sm:$0xff]
    %v924 = vld [vmem:[#allocation8 + $0x7a8] sm:$0xff]
    %v925 = vld [vmem:[#allocation8 + $0x7b0] sm:$0xff]
    %v926 = vld [vmem:[#allocation8 + $0x7b8] sm:$0xff]
    %v927 = vld [vmem:[#allocation8 + $0x7c0] sm:$0xff]
    %v928 = vld [vmem:[#allocation8 + $0x7c8] sm:$0xff]
    %v929 = vld [vmem:[#allocation8 + $0x7d0] sm:$0xff]
    %v930 = vld [vmem:[#allocation8 + $0x7d8] sm:$0xff]
    %v931 = vld [vmem:[#allocation8 + $0x7e0] sm:$0xff]
    %v932 = vld [vmem:[#allocation8 + $0x7e8] sm:$0xff]
    %v933 = vld [vmem:[#allocation8 + $0x7f0] sm:$0xff]
    %v934 = vld [vmem:[#allocation8 + $0x7f8] sm:$0xff]
    %v935 = vld [vmem:[%s6] sm:$0xff]
    %v937 = vlaneseq
    %v938 = vshrl.u32 %v937, 7
    %v939 = vsub.s32 0, %v938
    %v940 = vrot.slane %v935, %v939
    %v941 = vlaneseq
    %v942 = vshrl.u32 %v941, 7
    %v943 = vsub.s32 1, %v942
    %v944 = vrot.slane %v935, %v943
    %v945 = vlaneseq
    %v946 = vshrl.u32 %v945, 7
    %v947 = vsub.s32 2, %v946
    %v948 = vrot.slane %v935, %v947
    %v949 = vlaneseq
    %v950 = vshrl.u32 %v949, 7
    %v951 = vsub.s32 3, %v950
    %v952 = vrot.slane %v935, %v951
    %v953 = vlaneseq
    %v954 = vshrl.u32 %v953, 7
    %v955 = vsub.s32 4, %v954
    %v956 = vrot.slane %v935, %v955
    %v957 = vlaneseq
    %v958 = vshrl.u32 %v957, 7
    %v959 = vsub.s32 5, %v958
    %v960 = vrot.slane %v935, %v959
    %v961 = vlaneseq
    %v962 = vshrl.u32 %v961, 7
    %v963 = vsub.s32 6, %v962
    %v964 = vrot.slane %v935, %v963
    %v965 = vlaneseq
    %v966 = vshrl.u32 %v965, 7
    %v967 = vsub.s32 7, %v966
    %v968 = vrot.slane %v935, %v967
    %v1233 = vunpack.c.l.b16 %v679
    %v1234 = vunpack.c.h.b16 %v679
    %v1235 = vunpack.c.l.b16 %v680
    %v1236 = vunpack.c.h.b16 %v680
    %v1237 = vunpack.c.l.b16 %v681
    %v1238 = vunpack.c.h.b16 %v681
    %v1239 = vunpack.c.l.b16 %v682
    %v1240 = vunpack.c.h.b16 %v682
    %v1241 = vunpack.c.l.b16 %v683
    %v1242 = vunpack.c.h.b16 %v683
    %v1243 = vunpack.c.l.b16 %v684
    %v1244 = vunpack.c.h.b16 %v684
    %v1245 = vunpack.c.l.b16 %v685
    %v1246 = vunpack.c.h.b16 %v685
    %v1247 = vunpack.c.l.b16 %v686
    %v1248 = vunpack.c.h.b16 %v686
    %v1249 = vunpack.c.l.b16 %v687
    %v1250 = vunpack.c.h.b16 %v687
    %v1251 = vunpack.c.l.b16 %v688
    %v1252 = vunpack.c.h.b16 %v688
    %v1253 = vunpack.c.l.b16 %v689
    %v1254 = vunpack.c.h.b16 %v689
    %v1255 = vunpack.c.l.b16 %v690
    %v1256 = vunpack.c.h.b16 %v690
    %v1257 = vunpack.c.l.b16 %v691
    %v1258 = vunpack.c.h.b16 %v691
    %v1259 = vunpack.c.l.b16 %v692
    %v1260 = vunpack.c.h.b16 %v692
    %v1261 = vunpack.c.l.b16 %v693
    %v1262 = vunpack.c.h.b16 %v693
    %v1263 = vunpack.c.l.b16 %v694
    %v1264 = vunpack.c.h.b16 %v694
    %v1265 = vunpack.c.l.b16 %v695
    %v1266 = vunpack.c.h.b16 %v695
    %v1267 = vunpack.c.l.b16 %v696
    %v1268 = vunpack.c.h.b16 %v696
    %v1269 = vunpack.c.l.b16 %v697
    %v1270 = vunpack.c.h.b16 %v697
    %v1271 = vunpack.c.l.b16 %v698
    %v1272 = vunpack.c.h.b16 %v698
    %v1273 = vunpack.c.l.b16 %v699
    %v1274 = vunpack.c.h.b16 %v699
    %v1275 = vunpack.c.l.b16 %v700
    %v1276 = vunpack.c.h.b16 %v700
    %v1277 = vunpack.c.l.b16 %v701
    %v1278 = vunpack.c.h.b16 %v701
    %v1279 = vunpack.c.l.b16 %v702
    %v1280 = vunpack.c.h.b16 %v702
    %v1281 = vunpack.c.l.b16 %v703
    %v1282 = vunpack.c.h.b16 %v703
    %v1283 = vunpack.c.l.b16 %v704
    %v1284 = vunpack.c.h.b16 %v704
    %v1285 = vunpack.c.l.b16 %v705
    %v1286 = vunpack.c.h.b16 %v705
    %v1287 = vunpack.c.l.b16 %v706
    %v1288 = vunpack.c.h.b16 %v706
    %v1289 = vunpack.c.l.b16 %v707
    %v1290 = vunpack.c.h.b16 %v707
    %v1291 = vunpack.c.l.b16 %v708
    %v1292 = vunpack.c.h.b16 %v708
    %v1293 = vunpack.c.l.b16 %v709
    %v1294 = vunpack.c.h.b16 %v709
    %v1295 = vunpack.c.l.b16 %v710
    %v1296 = vunpack.c.h.b16 %v710
    %v1297 = vunpack.c.l.b16 %v711
    %v1298 = vunpack.c.h.b16 %v711
    %v1299 = vunpack.c.l.b16 %v712
    %v1300 = vunpack.c.h.b16 %v712
    %v1301 = vunpack.c.l.b16 %v713
    %v1302 = vunpack.c.h.b16 %v713
    %v1303 = vunpack.c.l.b16 %v714
    %v1304 = vunpack.c.h.b16 %v714
    %v1305 = vunpack.c.l.b16 %v715
    %v1306 = vunpack.c.h.b16 %v715
    %v1307 = vunpack.c.l.b16 %v716
    %v1308 = vunpack.c.h.b16 %v716
    %v1309 = vunpack.c.l.b16 %v717
    %v1310 = vunpack.c.h.b16 %v717
    %v1311 = vunpack.c.l.b16 %v718
    %v1312 = vunpack.c.h.b16 %v718
    %v1313 = vunpack.c.l.b16 %v719
    %v1314 = vunpack.c.h.b16 %v719
    %v1315 = vunpack.c.l.b16 %v720
    %v1316 = vunpack.c.h.b16 %v720
    %v1317 = vunpack.c.l.b16 %v721
    %v1318 = vunpack.c.h.b16 %v721
    %v1319 = vunpack.c.l.b16 %v722
    %v1320 = vunpack.c.h.b16 %v722
    %v1321 = vunpack.c.l.b16 %v723
    %v1322 = vunpack.c.h.b16 %v723
    %v1323 = vunpack.c.l.b16 %v724
    %v1324 = vunpack.c.h.b16 %v724
    %v1325 = vunpack.c.l.b16 %v725
    %v1326 = vunpack.c.h.b16 %v725
    %v1327 = vunpack.c.l.b16 %v726
    %v1328 = vunpack.c.h.b16 %v726
    %v1329 = vunpack.c.l.b16 %v727
    %v1330 = vunpack.c.h.b16 %v727
    %v1331 = vunpack.c.l.b16 %v728
    %v1332 = vunpack.c.h.b16 %v728
    %v1333 = vunpack.c.l.b16 %v729
    %v1334 = vunpack.c.h.b16 %v729
    %v1335 = vunpack.c.l.b16 %v730
    %v1336 = vunpack.c.h.b16 %v730
    %v1337 = vunpack.c.l.b16 %v731
    %v1338 = vunpack.c.h.b16 %v731
    %v1339 = vunpack.c.l.b16 %v732
    %v1340 = vunpack.c.h.b16 %v732
    %v1341 = vunpack.c.l.b16 %v733
    %v1342 = vunpack.c.h.b16 %v733
    %v1343 = vunpack.c.l.b16 %v734
    %v1344 = vunpack.c.h.b16 %v734
    %v1345 = vunpack.c.l.b16 %v735
    %v1346 = vunpack.c.h.b16 %v735
    %v1347 = vunpack.c.l.b16 %v736
    %v1348 = vunpack.c.h.b16 %v736
    %v1349 = vunpack.c.l.b16 %v737
    %v1350 = vunpack.c.h.b16 %v737
    %v1351 = vunpack.c.l.b16 %v738
    %v1352 = vunpack.c.h.b16 %v738
    %v1353 = vunpack.c.l.b16 %v739
    %v1354 = vunpack.c.h.b16 %v739
    %v1355 = vunpack.c.l.b16 %v740
    %v1356 = vunpack.c.h.b16 %v740
    %v1357 = vunpack.c.l.b16 %v741
    %v1358 = vunpack.c.h.b16 %v741
    %v1359 = vunpack.c.l.b16 %v742
    %v1360 = vunpack.c.h.b16 %v742
    %v1361 = vunpack.c.l.b16 %v743
    %v1362 = vunpack.c.h.b16 %v743
    %v1363 = vunpack.c.l.b16 %v744
    %v1364 = vunpack.c.h.b16 %v744
    %v1365 = vunpack.c.l.b16 %v745
    %v1366 = vunpack.c.h.b16 %v745
    %v1367 = vunpack.c.l.b16 %v746
    %v1368 = vunpack.c.h.b16 %v746
    %v1369 = vunpack.c.l.b16 %v747
    %v1370 = vunpack.c.h.b16 %v747
    %v1371 = vunpack.c.l.b16 %v748
    %v1372 = vunpack.c.h.b16 %v748
    %v1373 = vunpack.c.l.b16 %v749
    %v1374 = vunpack.c.h.b16 %v749
    %v1375 = vunpack.c.l.b16 %v750
    %v1376 = vunpack.c.h.b16 %v750
    %v1377 = vunpack.c.l.b16 %v751
    %v1378 = vunpack.c.h.b16 %v751
    %v1379 = vunpack.c.l.b16 %v752
    %v1380 = vunpack.c.h.b16 %v752
    %v1381 = vunpack.c.l.b16 %v753
    %v1382 = vunpack.c.h.b16 %v753
    %v1383 = vunpack.c.l.b16 %v754
    %v1384 = vunpack.c.h.b16 %v754
    %v1385 = vunpack.c.l.b16 %v755
    %v1386 = vunpack.c.h.b16 %v755
    %v1387 = vunpack.c.l.b16 %v756
    %v1388 = vunpack.c.h.b16 %v756
    %v1389 = vunpack.c.l.b16 %v757
    %v1390 = vunpack.c.h.b16 %v757
    %v1391 = vunpack.c.l.b16 %v758
    %v1392 = vunpack.c.h.b16 %v758
    %v1393 = vunpack.c.l.b16 %v759
    %v1394 = vunpack.c.h.b16 %v759
    %v1395 = vunpack.c.l.b16 %v760
    %v1396 = vunpack.c.h.b16 %v760
    %v1397 = vunpack.c.l.b16 %v761
    %v1398 = vunpack.c.h.b16 %v761
    %v1399 = vunpack.c.l.b16 %v762
    %v1400 = vunpack.c.h.b16 %v762
    %v1401 = vunpack.c.l.b16 %v763
    %v1402 = vunpack.c.h.b16 %v763
    %v1403 = vunpack.c.l.b16 %v764
    %v1404 = vunpack.c.h.b16 %v764
    %v1405 = vunpack.c.l.b16 %v765
    %v1406 = vunpack.c.h.b16 %v765
    %v1407 = vunpack.c.l.b16 %v766
    %v1408 = vunpack.c.h.b16 %v766
    %v1409 = vunpack.c.l.b16 %v767
    %v1410 = vunpack.c.h.b16 %v767
    %v1411 = vunpack.c.l.b16 %v768
    %v1412 = vunpack.c.h.b16 %v768
    %v1413 = vunpack.c.l.b16 %v769
    %v1414 = vunpack.c.h.b16 %v769
    %v1415 = vunpack.c.l.b16 %v770
    %v1416 = vunpack.c.h.b16 %v770
    %v1417 = vunpack.c.l.b16 %v771
    %v1418 = vunpack.c.h.b16 %v771
    %v1419 = vunpack.c.l.b16 %v772
    %v1420 = vunpack.c.h.b16 %v772
    %v1421 = vunpack.c.l.b16 %v773
    %v1422 = vunpack.c.h.b16 %v773
    %v1423 = vunpack.c.l.b16 %v774
    %v1424 = vunpack.c.h.b16 %v774
    %v1425 = vunpack.c.l.b16 %v775
    %v1426 = vunpack.c.h.b16 %v775
    %v1427 = vunpack.c.l.b16 %v776
    %v1428 = vunpack.c.h.b16 %v776
    %v1429 = vunpack.c.l.b16 %v777
    %v1430 = vunpack.c.h.b16 %v777
    %v1431 = vunpack.c.l.b16 %v778
    %v1432 = vunpack.c.h.b16 %v778
    %v1433 = vunpack.c.l.b16 %v779
    %v1434 = vunpack.c.h.b16 %v779
    %v1435 = vunpack.c.l.b16 %v780
    %v1436 = vunpack.c.h.b16 %v780
    %v1437 = vunpack.c.l.b16 %v781
    %v1438 = vunpack.c.h.b16 %v781
    %v1439 = vunpack.c.l.b16 %v782
    %v1440 = vunpack.c.h.b16 %v782
    %v1441 = vunpack.c.l.b16 %v783
    %v1442 = vunpack.c.h.b16 %v783
    %v1443 = vunpack.c.l.b16 %v784
    %v1444 = vunpack.c.h.b16 %v784
    %v1445 = vunpack.c.l.b16 %v785
    %v1446 = vunpack.c.h.b16 %v785
    %v1447 = vunpack.c.l.b16 %v786
    %v1448 = vunpack.c.h.b16 %v786
    %v1449 = vunpack.c.l.b16 %v787
    %v1450 = vunpack.c.h.b16 %v787
    %v1451 = vunpack.c.l.b16 %v788
    %v1452 = vunpack.c.h.b16 %v788
    %v1453 = vunpack.c.l.b16 %v789
    %v1454 = vunpack.c.h.b16 %v789
    %v1455 = vunpack.c.l.b16 %v790
    %v1456 = vunpack.c.h.b16 %v790
    %v1457 = vunpack.c.l.b16 %v791
    %v1458 = vunpack.c.h.b16 %v791
    %v1459 = vunpack.c.l.b16 %v792
    %v1460 = vunpack.c.h.b16 %v792
    %v1461 = vunpack.c.l.b16 %v793
    %v1462 = vunpack.c.h.b16 %v793
    %v1463 = vunpack.c.l.b16 %v794
    %v1464 = vunpack.c.h.b16 %v794
    %v1465 = vunpack.c.l.b16 %v795
    %v1466 = vunpack.c.h.b16 %v795
    %v1467 = vunpack.c.l.b16 %v796
    %v1468 = vunpack.c.h.b16 %v796
    %v1469 = vunpack.c.l.b16 %v797
    %v1470 = vunpack.c.h.b16 %v797
    %v1471 = vunpack.c.l.b16 %v798
    %v1472 = vunpack.c.h.b16 %v798
    %v1473 = vunpack.c.l.b16 %v799
    %v1474 = vunpack.c.h.b16 %v799
    %v1475 = vunpack.c.l.b16 %v800
    %v1476 = vunpack.c.h.b16 %v800
    %v1477 = vunpack.c.l.b16 %v801
    %v1478 = vunpack.c.h.b16 %v801
    %v1479 = vunpack.c.l.b16 %v802
    %v1480 = vunpack.c.h.b16 %v802
    %v1481 = vunpack.c.l.b16 %v803
    %v1482 = vunpack.c.h.b16 %v803
    %v1483 = vunpack.c.l.b16 %v804
    %v1484 = vunpack.c.h.b16 %v804
    %v1485 = vunpack.c.l.b16 %v805
    %v1486 = vunpack.c.h.b16 %v805
    %v1487 = vunpack.c.l.b16 %v806
    %v1488 = vunpack.c.h.b16 %v806
    %v1489 = vunpack.c.l.b16 %v807
    %v1490 = vunpack.c.h.b16 %v807
    %v1491 = vunpack.c.l.b16 %v808
    %v1492 = vunpack.c.h.b16 %v808
    %v1493 = vunpack.c.l.b16 %v809
    %v1494 = vunpack.c.h.b16 %v809
    %v1495 = vunpack.c.l.b16 %v810
    %v1496 = vunpack.c.h.b16 %v810
    %v1497 = vunpack.c.l.b16 %v811
    %v1498 = vunpack.c.h.b16 %v811
    %v1499 = vunpack.c.l.b16 %v812
    %v1500 = vunpack.c.h.b16 %v812
    %v1501 = vunpack.c.l.b16 %v813
    %v1502 = vunpack.c.h.b16 %v813
    %v1503 = vunpack.c.l.b16 %v814
    %v1504 = vunpack.c.h.b16 %v814
    %v1505 = vunpack.c.l.b16 %v815
    %v1506 = vunpack.c.h.b16 %v815
    %v1507 = vunpack.c.l.b16 %v816
    %v1508 = vunpack.c.h.b16 %v816
    %v1509 = vunpack.c.l.b16 %v817
    %v1510 = vunpack.c.h.b16 %v817
    %v1511 = vunpack.c.l.b16 %v818
    %v1512 = vunpack.c.h.b16 %v818
    %v1513 = vunpack.c.l.b16 %v819
    %v1514 = vunpack.c.h.b16 %v819
    %v1515 = vunpack.c.l.b16 %v820
    %v1516 = vunpack.c.h.b16 %v820
    %v1517 = vunpack.c.l.b16 %v821
    %v1518 = vunpack.c.h.b16 %v821
    %v1519 = vunpack.c.l.b16 %v822
    %v1520 = vunpack.c.h.b16 %v822
    %v1521 = vunpack.c.l.b16 %v823
    %v1522 = vunpack.c.h.b16 %v823
    %v1523 = vunpack.c.l.b16 %v824
    %v1524 = vunpack.c.h.b16 %v824
    %v1525 = vunpack.c.l.b16 %v825
    %v1526 = vunpack.c.h.b16 %v825
    %v1527 = vunpack.c.l.b16 %v826
    %v1528 = vunpack.c.h.b16 %v826
    %v1529 = vunpack.c.l.b16 %v827
    %v1530 = vunpack.c.h.b16 %v827
    %v1531 = vunpack.c.l.b16 %v828
    %v1532 = vunpack.c.h.b16 %v828
    %v1533 = vunpack.c.l.b16 %v829
    %v1534 = vunpack.c.h.b16 %v829
    %v1535 = vunpack.c.l.b16 %v830
    %v1536 = vunpack.c.h.b16 %v830
    %v1537 = vunpack.c.l.b16 %v831
    %v1538 = vunpack.c.h.b16 %v831
    %v1539 = vunpack.c.l.b16 %v832
    %v1540 = vunpack.c.h.b16 %v832
    %v1541 = vunpack.c.l.b16 %v833
    %v1542 = vunpack.c.h.b16 %v833
    %v1543 = vunpack.c.l.b16 %v834
    %v1544 = vunpack.c.h.b16 %v834
    %v1545 = vunpack.c.l.b16 %v835
    %v1546 = vunpack.c.h.b16 %v835
    %v1547 = vunpack.c.l.b16 %v836
    %v1548 = vunpack.c.h.b16 %v836
    %v1549 = vunpack.c.l.b16 %v837
    %v1550 = vunpack.c.h.b16 %v837
    %v1551 = vunpack.c.l.b16 %v838
    %v1552 = vunpack.c.h.b16 %v838
    %v1553 = vunpack.c.l.b16 %v839
    %v1554 = vunpack.c.h.b16 %v839
    %v1555 = vunpack.c.l.b16 %v840
    %v1556 = vunpack.c.h.b16 %v840
    %v1557 = vunpack.c.l.b16 %v841
    %v1558 = vunpack.c.h.b16 %v841
    %v1559 = vunpack.c.l.b16 %v842
    %v1560 = vunpack.c.h.b16 %v842
    %v1561 = vunpack.c.l.b16 %v843
    %v1562 = vunpack.c.h.b16 %v843
    %v1563 = vunpack.c.l.b16 %v844
    %v1564 = vunpack.c.h.b16 %v844
    %v1565 = vunpack.c.l.b16 %v845
    %v1566 = vunpack.c.h.b16 %v845
    %v1567 = vunpack.c.l.b16 %v846
    %v1568 = vunpack.c.h.b16 %v846
    %v1569 = vunpack.c.l.b16 %v847
    %v1570 = vunpack.c.h.b16 %v847
    %v1571 = vunpack.c.l.b16 %v848
    %v1572 = vunpack.c.h.b16 %v848
    %v1573 = vunpack.c.l.b16 %v849
    %v1574 = vunpack.c.h.b16 %v849
    %v1575 = vunpack.c.l.b16 %v850
    %v1576 = vunpack.c.h.b16 %v850
    %v1577 = vunpack.c.l.b16 %v851
    %v1578 = vunpack.c.h.b16 %v851
    %v1579 = vunpack.c.l.b16 %v852
    %v1580 = vunpack.c.h.b16 %v852
    %v1581 = vunpack.c.l.b16 %v853
    %v1582 = vunpack.c.h.b16 %v853
    %v1583 = vunpack.c.l.b16 %v854
    %v1584 = vunpack.c.h.b16 %v854
    %v1585 = vunpack.c.l.b16 %v855
    %v1586 = vunpack.c.h.b16 %v855
    %v1587 = vunpack.c.l.b16 %v856
    %v1588 = vunpack.c.h.b16 %v856
    %v1589 = vunpack.c.l.b16 %v857
    %v1590 = vunpack.c.h.b16 %v857
    %v1591 = vunpack.c.l.b16 %v858
    %v1592 = vunpack.c.h.b16 %v858
    %v1593 = vunpack.c.l.b16 %v859
    %v1594 = vunpack.c.h.b16 %v859
    %v1595 = vunpack.c.l.b16 %v860
    %v1596 = vunpack.c.h.b16 %v860
    %v1597 = vunpack.c.l.b16 %v861
    %v1598 = vunpack.c.h.b16 %v861
    %v1599 = vunpack.c.l.b16 %v862
    %v1600 = vunpack.c.h.b16 %v862
    %v1601 = vunpack.c.l.b16 %v863
    %v1602 = vunpack.c.h.b16 %v863
    %v1603 = vunpack.c.l.b16 %v864
    %v1604 = vunpack.c.h.b16 %v864
    %v1605 = vunpack.c.l.b16 %v865
    %v1606 = vunpack.c.h.b16 %v865
    %v1607 = vunpack.c.l.b16 %v866
    %v1608 = vunpack.c.h.b16 %v866
    %v1609 = vunpack.c.l.b16 %v867
    %v1610 = vunpack.c.h.b16 %v867
    %v1611 = vunpack.c.l.b16 %v868
    %v1612 = vunpack.c.h.b16 %v868
    %v1613 = vunpack.c.l.b16 %v869
    %v1614 = vunpack.c.h.b16 %v869
    %v1615 = vunpack.c.l.b16 %v870
    %v1616 = vunpack.c.h.b16 %v870
    %v1617 = vunpack.c.l.b16 %v871
    %v1618 = vunpack.c.h.b16 %v871
    %v1619 = vunpack.c.l.b16 %v872
    %v1620 = vunpack.c.h.b16 %v872
    %v1621 = vunpack.c.l.b16 %v873
    %v1622 = vunpack.c.h.b16 %v873
    %v1623 = vunpack.c.l.b16 %v874
    %v1624 = vunpack.c.h.b16 %v874
    %v1625 = vunpack.c.l.b16 %v875
    %v1626 = vunpack.c.h.b16 %v875
    %v1627 = vunpack.c.l.b16 %v876
    %v1628 = vunpack.c.h.b16 %v876
    %v1629 = vunpack.c.l.b16 %v877
    %v1630 = vunpack.c.h.b16 %v877
    %v1631 = vunpack.c.l.b16 %v878
    %v1632 = vunpack.c.h.b16 %v878
    %v1633 = vunpack.c.l.b16 %v879
    %v1634 = vunpack.c.h.b16 %v879
    %v1635 = vunpack.c.l.b16 %v880
    %v1636 = vunpack.c.h.b16 %v880
    %v1637 = vunpack.c.l.b16 %v881
    %v1638 = vunpack.c.h.b16 %v881
    %v1639 = vunpack.c.l.b16 %v882
    %v1640 = vunpack.c.h.b16 %v882
    %v1641 = vunpack.c.l.b16 %v883
    %v1642 = vunpack.c.h.b16 %v883
    %v1643 = vunpack.c.l.b16 %v884
    %v1644 = vunpack.c.h.b16 %v884
    %v1645 = vunpack.c.l.b16 %v885
    %v1646 = vunpack.c.h.b16 %v885
    %v1647 = vunpack.c.l.b16 %v886
    %v1648 = vunpack.c.h.b16 %v886
    %v1649 = vunpack.c.l.b16 %v887
    %v1650 = vunpack.c.h.b16 %v887
    %v1651 = vunpack.c.l.b16 %v888
    %v1652 = vunpack.c.h.b16 %v888
    %v1653 = vunpack.c.l.b16 %v889
    %v1654 = vunpack.c.h.b16 %v889
    %v1655 = vunpack.c.l.b16 %v890
    %v1656 = vunpack.c.h.b16 %v890
    %v1657 = vunpack.c.l.b16 %v891
    %v1658 = vunpack.c.h.b16 %v891
    %v1659 = vunpack.c.l.b16 %v892
    %v1660 = vunpack.c.h.b16 %v892
    %v1661 = vunpack.c.l.b16 %v893
    %v1662 = vunpack.c.h.b16 %v893
    %v1663 = vunpack.c.l.b16 %v894
    %v1664 = vunpack.c.h.b16 %v894
    %v1665 = vunpack.c.l.b16 %v895
    %v1666 = vunpack.c.h.b16 %v895
    %v1667 = vunpack.c.l.b16 %v896
    %v1668 = vunpack.c.h.b16 %v896
    %v1669 = vunpack.c.l.b16 %v897
    %v1670 = vunpack.c.h.b16 %v897
    %v1671 = vunpack.c.l.b16 %v898
    %v1672 = vunpack.c.h.b16 %v898
    %v1673 = vunpack.c.l.b16 %v899
    %v1674 = vunpack.c.h.b16 %v899
    %v1675 = vunpack.c.l.b16 %v900
    %v1676 = vunpack.c.h.b16 %v900
    %v1677 = vunpack.c.l.b16 %v901
    %v1678 = vunpack.c.h.b16 %v901
    %v1679 = vunpack.c.l.b16 %v902
    %v1680 = vunpack.c.h.b16 %v902
    %v1681 = vunpack.c.l.b16 %v903
    %v1682 = vunpack.c.h.b16 %v903
    %v1683 = vunpack.c.l.b16 %v904
    %v1684 = vunpack.c.h.b16 %v904
    %v1685 = vunpack.c.l.b16 %v905
    %v1686 = vunpack.c.h.b16 %v905
    %v1687 = vunpack.c.l.b16 %v906
    %v1688 = vunpack.c.h.b16 %v906
    %v1689 = vunpack.c.l.b16 %v907
    %v1690 = vunpack.c.h.b16 %v907
    %v1691 = vunpack.c.l.b16 %v908
    %v1692 = vunpack.c.h.b16 %v908
    %v1693 = vunpack.c.l.b16 %v909
    %v1694 = vunpack.c.h.b16 %v909
    %v1695 = vunpack.c.l.b16 %v910
    %v1696 = vunpack.c.h.b16 %v910
    %v1697 = vunpack.c.l.b16 %v911
    %v1698 = vunpack.c.h.b16 %v911
    %v1699 = vunpack.c.l.b16 %v912
    %v1700 = vunpack.c.h.b16 %v912
    %v1701 = vunpack.c.l.b16 %v913
    %v1702 = vunpack.c.h.b16 %v913
    %v1703 = vunpack.c.l.b16 %v914
    %v1704 = vunpack.c.h.b16 %v914
    %v1705 = vunpack.c.l.b16 %v915
    %v1706 = vunpack.c.h.b16 %v915
    %v1707 = vunpack.c.l.b16 %v916
    %v1708 = vunpack.c.h.b16 %v916
    %v1709 = vunpack.c.l.b16 %v917
    %v1710 = vunpack.c.h.b16 %v917
    %v1711 = vunpack.c.l.b16 %v918
    %v1712 = vunpack.c.h.b16 %v918
    %v1713 = vunpack.c.l.b16 %v919
    %v1714 = vunpack.c.h.b16 %v919
    %v1715 = vunpack.c.l.b16 %v920
    %v1716 = vunpack.c.h.b16 %v920
    %v1717 = vunpack.c.l.b16 %v921
    %v1718 = vunpack.c.h.b16 %v921
    %v1719 = vunpack.c.l.b16 %v922
    %v1720 = vunpack.c.h.b16 %v922
    %v1721 = vunpack.c.l.b16 %v923
    %v1722 = vunpack.c.h.b16 %v923
    %v1723 = vunpack.c.l.b16 %v924
    %v1724 = vunpack.c.h.b16 %v924
    %v1725 = vunpack.c.l.b16 %v925
    %v1726 = vunpack.c.h.b16 %v925
    %v1727 = vunpack.c.l.b16 %v926
    %v1728 = vunpack.c.h.b16 %v926
    %v1729 = vunpack.c.l.b16 %v927
    %v1730 = vunpack.c.h.b16 %v927
    %v1731 = vunpack.c.l.b16 %v928
    %v1732 = vunpack.c.h.b16 %v928
    %v1733 = vunpack.c.l.b16 %v929
    %v1734 = vunpack.c.h.b16 %v929
    %v1735 = vunpack.c.l.b16 %v930
    %v1736 = vunpack.c.h.b16 %v930
    %v1737 = vunpack.c.l.b16 %v931
    %v1738 = vunpack.c.h.b16 %v931
    %v1739 = vunpack.c.l.b16 %v932
    %v1740 = vunpack.c.h.b16 %v932
    %v1741 = vunpack.c.l.b16 %v933
    %v1742 = vunpack.c.h.b16 %v933
    %v1743 = vunpack.c.l.b16 %v934
    %v1744 = vunpack.c.h.b16 %v934
    %v1745 = vpack.c.b16 %v1241, %v1233
    %v1746 = vpack.c.b16 %v1242, %v1234
    %v1747 = vpack.c.b16 %v1243, %v1235
    %v1748 = vpack.c.b16 %v1244, %v1236
    %v1749 = vpack.c.b16 %v1245, %v1237
    %v1750 = vpack.c.b16 %v1246, %v1238
    %v1751 = vpack.c.b16 %v1247, %v1239
    %v1752 = vpack.c.b16 %v1248, %v1240
    %v1753 = vpack.c.b16 %v1257, %v1249
    %v1754 = vpack.c.b16 %v1258, %v1250
    %v1755 = vpack.c.b16 %v1259, %v1251
    %v1756 = vpack.c.b16 %v1260, %v1252
    %v1757 = vpack.c.b16 %v1261, %v1253
    %v1758 = vpack.c.b16 %v1262, %v1254
    %v1759 = vpack.c.b16 %v1263, %v1255
    %v1760 = vpack.c.b16 %v1264, %v1256
    %v1761 = vpack.c.b16 %v1273, %v1265
    %v1762 = vpack.c.b16 %v1274, %v1266
    %v1763 = vpack.c.b16 %v1275, %v1267
    %v1764 = vpack.c.b16 %v1276, %v1268
    %v1765 = vpack.c.b16 %v1277, %v1269
    %v1766 = vpack.c.b16 %v1278, %v1270
    %v1767 = vpack.c.b16 %v1279, %v1271
    %v1768 = vpack.c.b16 %v1280, %v1272
    %v1769 = vpack.c.b16 %v1289, %v1281
    %v1770 = vpack.c.b16 %v1290, %v1282
    %v1771 = vpack.c.b16 %v1291, %v1283
    %v1772 = vpack.c.b16 %v1292, %v1284
    %v1773 = vpack.c.b16 %v1293, %v1285
    %v1774 = vpack.c.b16 %v1294, %v1286
    %v1775 = vpack.c.b16 %v1295, %v1287
    %v1776 = vpack.c.b16 %v1296, %v1288
    %v1777 = vpack.c.b16 %v1305, %v1297
    %v1778 = vpack.c.b16 %v1306, %v1298
    %v1779 = vpack.c.b16 %v1307, %v1299
    %v1780 = vpack.c.b16 %v1308, %v1300
    %v1781 = vpack.c.b16 %v1309, %v1301
    %v1782 = vpack.c.b16 %v1310, %v1302
    %v1783 = vpack.c.b16 %v1311, %v1303
    %v1784 = vpack.c.b16 %v1312, %v1304
    %v1785 = vpack.c.b16 %v1321, %v1313
    %v1786 = vpack.c.b16 %v1322, %v1314
    %v1787 = vpack.c.b16 %v1323, %v1315
    %v1788 = vpack.c.b16 %v1324, %v1316
    %v1789 = vpack.c.b16 %v1325, %v1317
    %v1790 = vpack.c.b16 %v1326, %v1318
    %v1791 = vpack.c.b16 %v1327, %v1319
    %v1792 = vpack.c.b16 %v1328, %v1320
    %v1793 = vpack.c.b16 %v1337, %v1329
    %v1794 = vpack.c.b16 %v1338, %v1330
    %v1795 = vpack.c.b16 %v1339, %v1331
    %v1796 = vpack.c.b16 %v1340, %v1332
    %v1797 = vpack.c.b16 %v1341, %v1333
    %v1798 = vpack.c.b16 %v1342, %v1334
    %v1799 = vpack.c.b16 %v1343, %v1335
    %v1800 = vpack.c.b16 %v1344, %v1336
    %v1801 = vpack.c.b16 %v1353, %v1345
    %v1802 = vpack.c.b16 %v1354, %v1346
    %v1803 = vpack.c.b16 %v1355, %v1347
    %v1804 = vpack.c.b16 %v1356, %v1348
    %v1805 = vpack.c.b16 %v1357, %v1349
    %v1806 = vpack.c.b16 %v1358, %v1350
    %v1807 = vpack.c.b16 %v1359, %v1351
    %v1808 = vpack.c.b16 %v1360, %v1352
    %v1809 = vpack.c.b16 %v1369, %v1361
    %v1810 = vpack.c.b16 %v1370, %v1362
    %v1811 = vpack.c.b16 %v1371, %v1363
    %v1812 = vpack.c.b16 %v1372, %v1364
    %v1813 = vpack.c.b16 %v1373, %v1365
    %v1814 = vpack.c.b16 %v1374, %v1366
    %v1815 = vpack.c.b16 %v1375, %v1367
    %v1816 = vpack.c.b16 %v1376, %v1368
    %v1817 = vpack.c.b16 %v1385, %v1377
    %v1818 = vpack.c.b16 %v1386, %v1378
    %v1819 = vpack.c.b16 %v1387, %v1379
    %v1820 = vpack.c.b16 %v1388, %v1380
    %v1821 = vpack.c.b16 %v1389, %v1381
    %v1822 = vpack.c.b16 %v1390, %v1382
    %v1823 = vpack.c.b16 %v1391, %v1383
    %v1824 = vpack.c.b16 %v1392, %v1384
    %v1825 = vpack.c.b16 %v1401, %v1393
    %v1826 = vpack.c.b16 %v1402, %v1394
    %v1827 = vpack.c.b16 %v1403, %v1395
    %v1828 = vpack.c.b16 %v1404, %v1396
    %v1829 = vpack.c.b16 %v1405, %v1397
    %v1830 = vpack.c.b16 %v1406, %v1398
    %v1831 = vpack.c.b16 %v1407, %v1399
    %v1832 = vpack.c.b16 %v1408, %v1400
    %v1833 = vpack.c.b16 %v1417, %v1409
    %v1834 = vpack.c.b16 %v1418, %v1410
    %v1835 = vpack.c.b16 %v1419, %v1411
    %v1836 = vpack.c.b16 %v1420, %v1412
    %v1837 = vpack.c.b16 %v1421, %v1413
    %v1838 = vpack.c.b16 %v1422, %v1414
    %v1839 = vpack.c.b16 %v1423, %v1415
    %v1840 = vpack.c.b16 %v1424, %v1416
    %v1841 = vpack.c.b16 %v1433, %v1425
    %v1842 = vpack.c.b16 %v1434, %v1426
    %v1843 = vpack.c.b16 %v1435, %v1427
    %v1844 = vpack.c.b16 %v1436, %v1428
    %v1845 = vpack.c.b16 %v1437, %v1429
    %v1846 = vpack.c.b16 %v1438, %v1430
    %v1847 = vpack.c.b16 %v1439, %v1431
    %v1848 = vpack.c.b16 %v1440, %v1432
    %v1849 = vpack.c.b16 %v1449, %v1441
    %v1850 = vpack.c.b16 %v1450, %v1442
    %v1851 = vpack.c.b16 %v1451, %v1443
    %v1852 = vpack.c.b16 %v1452, %v1444
    %v1853 = vpack.c.b16 %v1453, %v1445
    %v1854 = vpack.c.b16 %v1454, %v1446
    %v1855 = vpack.c.b16 %v1455, %v1447
    %v1856 = vpack.c.b16 %v1456, %v1448
    %v1857 = vpack.c.b16 %v1465, %v1457
    %v1858 = vpack.c.b16 %v1466, %v1458
    %v1859 = vpack.c.b16 %v1467, %v1459
    %v1860 = vpack.c.b16 %v1468, %v1460
    %v1861 = vpack.c.b16 %v1469, %v1461
    %v1862 = vpack.c.b16 %v1470, %v1462
    %v1863 = vpack.c.b16 %v1471, %v1463
    %v1864 = vpack.c.b16 %v1472, %v1464
    %v1865 = vpack.c.b16 %v1481, %v1473
    %v1866 = vpack.c.b16 %v1482, %v1474
    %v1867 = vpack.c.b16 %v1483, %v1475
    %v1868 = vpack.c.b16 %v1484, %v1476
    %v1869 = vpack.c.b16 %v1485, %v1477
    %v1870 = vpack.c.b16 %v1486, %v1478
    %v1871 = vpack.c.b16 %v1487, %v1479
    %v1872 = vpack.c.b16 %v1488, %v1480
    %v1873 = vpack.c.b16 %v1497, %v1489
    %v1874 = vpack.c.b16 %v1498, %v1490
    %v1875 = vpack.c.b16 %v1499, %v1491
    %v1876 = vpack.c.b16 %v1500, %v1492
    %v1877 = vpack.c.b16 %v1501, %v1493
    %v1878 = vpack.c.b16 %v1502, %v1494
    %v1879 = vpack.c.b16 %v1503, %v1495
    %v1880 = vpack.c.b16 %v1504, %v1496
    %v1881 = vpack.c.b16 %v1513, %v1505
    %v1882 = vpack.c.b16 %v1514, %v1506
    %v1883 = vpack.c.b16 %v1515, %v1507
    %v1884 = vpack.c.b16 %v1516, %v1508
    %v1885 = vpack.c.b16 %v1517, %v1509
    %v1886 = vpack.c.b16 %v1518, %v1510
    %v1887 = vpack.c.b16 %v1519, %v1511
    %v1888 = vpack.c.b16 %v1520, %v1512
    %v1889 = vpack.c.b16 %v1529, %v1521
    %v1890 = vpack.c.b16 %v1530, %v1522
    %v1891 = vpack.c.b16 %v1531, %v1523
    %v1892 = vpack.c.b16 %v1532, %v1524
    %v1893 = vpack.c.b16 %v1533, %v1525
    %v1894 = vpack.c.b16 %v1534, %v1526
    %v1895 = vpack.c.b16 %v1535, %v1527
    %v1896 = vpack.c.b16 %v1536, %v1528
    %v1897 = vpack.c.b16 %v1545, %v1537
    %v1898 = vpack.c.b16 %v1546, %v1538
    %v1899 = vpack.c.b16 %v1547, %v1539
    %v1900 = vpack.c.b16 %v1548, %v1540
    %v1901 = vpack.c.b16 %v1549, %v1541
    %v1902 = vpack.c.b16 %v1550, %v1542
    %v1903 = vpack.c.b16 %v1551, %v1543
    %v1904 = vpack.c.b16 %v1552, %v1544
    %v1905 = vpack.c.b16 %v1561, %v1553
    %v1906 = vpack.c.b16 %v1562, %v1554
    %v1907 = vpack.c.b16 %v1563, %v1555
    %v1908 = vpack.c.b16 %v1564, %v1556
    %v1909 = vpack.c.b16 %v1565, %v1557
    %v1910 = vpack.c.b16 %v1566, %v1558
    %v1911 = vpack.c.b16 %v1567, %v1559
    %v1912 = vpack.c.b16 %v1568, %v1560
    %v1913 = vpack.c.b16 %v1577, %v1569
    %v1914 = vpack.c.b16 %v1578, %v1570
    %v1915 = vpack.c.b16 %v1579, %v1571
    %v1916 = vpack.c.b16 %v1580, %v1572
    %v1917 = vpack.c.b16 %v1581, %v1573
    %v1918 = vpack.c.b16 %v1582, %v1574
    %v1919 = vpack.c.b16 %v1583, %v1575
    %v1920 = vpack.c.b16 %v1584, %v1576
    %v1921 = vpack.c.b16 %v1593, %v1585
    %v1922 = vpack.c.b16 %v1594, %v1586
    %v1923 = vpack.c.b16 %v1595, %v1587
    %v1924 = vpack.c.b16 %v1596, %v1588
    %v1925 = vpack.c.b16 %v1597, %v1589
    %v1926 = vpack.c.b16 %v1598, %v1590
    %v1927 = vpack.c.b16 %v1599, %v1591
    %v1928 = vpack.c.b16 %v1600, %v1592
    %v1929 = vpack.c.b16 %v1609, %v1601
    %v1930 = vpack.c.b16 %v1610, %v1602
    %v1931 = vpack.c.b16 %v1611, %v1603
    %v1932 = vpack.c.b16 %v1612, %v1604
    %v1933 = vpack.c.b16 %v1613, %v1605
    %v1934 = vpack.c.b16 %v1614, %v1606
    %v1935 = vpack.c.b16 %v1615, %v1607
    %v1936 = vpack.c.b16 %v1616, %v1608
    %v1937 = vpack.c.b16 %v1625, %v1617
    %v1938 = vpack.c.b16 %v1626, %v1618
    %v1939 = vpack.c.b16 %v1627, %v1619
    %v1940 = vpack.c.b16 %v1628, %v1620
    %v1941 = vpack.c.b16 %v1629, %v1621
    %v1942 = vpack.c.b16 %v1630, %v1622
    %v1943 = vpack.c.b16 %v1631, %v1623
    %v1944 = vpack.c.b16 %v1632, %v1624
    %v1945 = vpack.c.b16 %v1641, %v1633
    %v1946 = vpack.c.b16 %v1642, %v1634
    %v1947 = vpack.c.b16 %v1643, %v1635
    %v1948 = vpack.c.b16 %v1644, %v1636
    %v1949 = vpack.c.b16 %v1645, %v1637
    %v1950 = vpack.c.b16 %v1646, %v1638
    %v1951 = vpack.c.b16 %v1647, %v1639
    %v1952 = vpack.c.b16 %v1648, %v1640
    %v1953 = vpack.c.b16 %v1657, %v1649
    %v1954 = vpack.c.b16 %v1658, %v1650
    %v1955 = vpack.c.b16 %v1659, %v1651
    %v1956 = vpack.c.b16 %v1660, %v1652
    %v1957 = vpack.c.b16 %v1661, %v1653
    %v1958 = vpack.c.b16 %v1662, %v1654
    %v1959 = vpack.c.b16 %v1663, %v1655
    %v1960 = vpack.c.b16 %v1664, %v1656
    %v1961 = vpack.c.b16 %v1673, %v1665
    %v1962 = vpack.c.b16 %v1674, %v1666
    %v1963 = vpack.c.b16 %v1675, %v1667
    %v1964 = vpack.c.b16 %v1676, %v1668
    %v1965 = vpack.c.b16 %v1677, %v1669
    %v1966 = vpack.c.b16 %v1678, %v1670
    %v1967 = vpack.c.b16 %v1679, %v1671
    %v1968 = vpack.c.b16 %v1680, %v1672
    %v1969 = vpack.c.b16 %v1689, %v1681
    %v1970 = vpack.c.b16 %v1690, %v1682
    %v1971 = vpack.c.b16 %v1691, %v1683
    %v1972 = vpack.c.b16 %v1692, %v1684
    %v1973 = vpack.c.b16 %v1693, %v1685
    %v1974 = vpack.c.b16 %v1694, %v1686
    %v1975 = vpack.c.b16 %v1695, %v1687
    %v1976 = vpack.c.b16 %v1696, %v1688
    %v1977 = vpack.c.b16 %v1705, %v1697
    %v1978 = vpack.c.b16 %v1706, %v1698
    %v1979 = vpack.c.b16 %v1707, %v1699
    %v1980 = vpack.c.b16 %v1708, %v1700
    %v1981 = vpack.c.b16 %v1709, %v1701
    %v1982 = vpack.c.b16 %v1710, %v1702
    %v1983 = vpack.c.b16 %v1711, %v1703
    %v1984 = vpack.c.b16 %v1712, %v1704
    %v1985 = vpack.c.b16 %v1721, %v1713
    %v1986 = vpack.c.b16 %v1722, %v1714
    %v1987 = vpack.c.b16 %v1723, %v1715
    %v1988 = vpack.c.b16 %v1724, %v1716
    %v1989 = vpack.c.b16 %v1725, %v1717
    %v1990 = vpack.c.b16 %v1726, %v1718
    %v1991 = vpack.c.b16 %v1727, %v1719
    %v1992 = vpack.c.b16 %v1728, %v1720
    %v1993 = vpack.c.b16 %v1737, %v1729
    %v1994 = vpack.c.b16 %v1738, %v1730
    %v1995 = vpack.c.b16 %v1739, %v1731
    %v1996 = vpack.c.b16 %v1740, %v1732
    %v1997 = vpack.c.b16 %v1741, %v1733
    %v1998 = vpack.c.b16 %v1742, %v1734
    %v1999 = vpack.c.b16 %v1743, %v1735
    %v2000 = vpack.c.b16 %v1744, %v1736
    %2257 = vmatprep.subr.bf16.mxu0 %v1746
    %2258 = vmatpush1.bf16.msra.mxu0 %v1745
    %2259 = vmatprep.subr.bf16.mxu0 %v1754
    %2260 = vmatpush1.bf16.msra.mxu0 %v1753
    %2261 = vmatprep.subr.bf16.mxu0 %v1762
    %2262 = vmatpush1.bf16.msra.mxu0 %v1761
    %2263 = vmatprep.subr.bf16.mxu0 %v1770
    %2264 = vmatpush1.bf16.msra.mxu0 %v1769
    %2265 = vmatprep.subr.bf16.mxu0 %v1778
    %2266 = vmatpush1.bf16.msra.mxu0 %v1777
    %2267 = vmatprep.subr.bf16.mxu0 %v1786
    %2268 = vmatpush1.bf16.msra.mxu0 %v1785
    %2269 = vmatprep.subr.bf16.mxu0 %v1794
    %2270 = vmatpush1.bf16.msra.mxu0 %v1793
    %2271 = vmatprep.subr.bf16.mxu0 %v1802
    %2272 = vmatpush1.bf16.msra.mxu0 %v1801
    %2273 = vmatprep.subr.bf16.mxu0 %v1810
    %2274 = vmatpush1.bf16.msra.mxu0 %v1809
    %2275 = vmatprep.subr.bf16.mxu0 %v1818
    %2276 = vmatpush1.bf16.msra.mxu0 %v1817
    %2277 = vmatprep.subr.bf16.mxu0 %v1826
    %2278 = vmatpush1.bf16.msra.mxu0 %v1825
    %2279 = vmatprep.subr.bf16.mxu0 %v1834
    %2280 = vmatpush1.bf16.msra.mxu0 %v1833
    %2281 = vmatprep.subr.bf16.mxu0 %v1842
    %2282 = vmatpush1.bf16.msra.mxu0 %v1841
    %2283 = vmatprep.subr.bf16.mxu0 %v1850
    %2284 = vmatpush1.bf16.msra.mxu0 %v1849
    %2285 = vmatprep.subr.bf16.mxu0 %v1858
    %2286 = vmatpush1.bf16.msra.mxu0 %v1857
    %2287 = vmatprep.subr.bf16.mxu0 %v1866
    %2288 = vmatpush1.bf16.msra.mxu0 %v1865
    %2289 = vmatprep.mubr.bf16.mxu0 %v676
    %2290 = vmatmul.mubr.bf16.gmra.mrb[0].mxu0 %v675
    %v2291 = vpop.f32.mrb[0].mxu0
    %v2292 = vadd.f32 %v940, %v2291
    %v2293 = vpop.f32.mrb[0].mxu0
    %v2294 = vadd.f32 %v944, %v2293
    %v2295 = vpop.f32.mrb[0].mxu0
    %v2296 = vadd.f32 %v940, %v2295
    %v2297 = vpop.f32.mrb[0].mxu0
    %v2298 = vadd.f32 %v944, %v2297
    %2299 = vdwg.mxu0
    %2300 = vmatprep.subr.bf16.mxu0 %v1874
    %2301 = vmatpush1.bf16.msra.mxu0 %v1873
    %2302 = vmatprep.subr.bf16.mxu0 %v1882
    %2303 = vmatpush1.bf16.msra.mxu0 %v1881
    %2304 = vmatprep.subr.bf16.mxu0 %v1890
    %2305 = vmatpush1.bf16.msra.mxu0 %v1889
    %2306 = vmatprep.subr.bf16.mxu0 %v1898
    %2307 = vmatpush1.bf16.msra.mxu0 %v1897
    %2308 = vmatprep.subr.bf16.mxu0 %v1906
    %2309 = vmatpush1.bf16.msra.mxu0 %v1905
    %2310 = vmatprep.subr.bf16.mxu0 %v1914
    %2311 = vmatpush1.bf16.msra.mxu0 %v1913
    %2312 = vmatprep.subr.bf16.mxu0 %v1922
    %2313 = vmatpush1.bf16.msra.mxu0 %v1921
    %2314 = vmatprep.subr.bf16.mxu0 %v1930
    %2315 = vmatpush1.bf16.msra.mxu0 %v1929
    %2316 = vmatprep.subr.bf16.mxu0 %v1938
    %2317 = vmatpush1.bf16.msra.mxu0 %v1937
    %2318 = vmatprep.subr.bf16.mxu0 %v1946
    %2319 = vmatpush1.bf16.msra.mxu0 %v1945
    %2320 = vmatprep.subr.bf16.mxu0 %v1954
    %2321 = vmatpush1.bf16.msra.mxu0 %v1953
    %2322 = vmatprep.subr.bf16.mxu0 %v1962
    %2323 = vmatpush1.bf16.msra.mxu0 %v1961
    %2324 = vmatprep.subr.bf16.mxu0 %v1970
    %2325 = vmatpush1.bf16.msra.mxu0 %v1969
    %2326 = vmatprep.subr.bf16.mxu0 %v1978
    %2327 = vmatpush1.bf16.msra.mxu0 %v1977
    %2328 = vmatprep.subr.bf16.mxu0 %v1986
    %2329 = vmatpush1.bf16.msra.mxu0 %v1985
    %2330 = vmatprep.subr.bf16.mxu0 %v1994
    %2331 = vmatpush1.bf16.msra.mxu0 %v1993
    %2332 = vmatprep.mubr.bf16.mxu0 %v678
    %2333 = vmatmul.mubr.bf16.gmra.mrb[0].mxu0 %v677
    %v2334 = vpop.f32.mrb[0].mxu0
    %v2335 = vadd.f32 %v2292, %v2334
    %v2336 = vpop.f32.mrb[0].mxu0
    %v2337 = vadd.f32 %v2294, %v2336
    %v2338 = vpop.f32.mrb[0].mxu0
    %v2339 = vadd.f32 %v2296, %v2338
    %v2340 = vpop.f32.mrb[0].mxu0
    %v2341 = vadd.f32 %v2298, %v2340
    %2342 = vdwg.mxu0
    %2343 = vmatprep.subr.bf16.mxu0 %v1748
    %2344 = vmatpush1.bf16.msra.mxu0 %v1747
    %2345 = vmatprep.subr.bf16.mxu0 %v1756
    %2346 = vmatpush1.bf16.msra.mxu0 %v1755
    %2347 = vmatprep.subr.bf16.mxu0 %v1764
    %2348 = vmatpush1.bf16.msra.mxu0 %v1763
    %2349 = vmatprep.subr.bf16.mxu0 %v1772
    %2350 = vmatpush1.bf16.msra.mxu0 %v1771
    %2351 = vmatprep.subr.bf16.mxu0 %v1780
    %2352 = vmatpush1.bf16.msra.mxu0 %v1779
    %2353 = vmatprep.subr.bf16.mxu0 %v1788
    %2354 = vmatpush1.bf16.msra.mxu0 %v1787
    %2355 = vmatprep.subr.bf16.mxu0 %v1796
    %2356 = vmatpush1.bf16.msra.mxu0 %v1795
    %2357 = vmatprep.subr.bf16.mxu0 %v1804
    %2358 = vmatpush1.bf16.msra.mxu0 %v1803
    %2359 = vmatprep.subr.bf16.mxu0 %v1812
    %2360 = vmatpush1.bf16.msra.mxu0 %v1811
    %2361 = vmatprep.subr.bf16.mxu0 %v1820
    %2362 = vmatpush1.bf16.msra.mxu0 %v1819
    %2363 = vmatprep.subr.bf16.mxu0 %v1828
    %2364 = vmatpush1.bf16.msra.mxu0 %v1827
    %2365 = vmatprep.subr.bf16.mxu0 %v1836
    %2366 = vmatpush1.bf16.msra.mxu0 %v1835
    %2367 = vmatprep.subr.bf16.mxu0 %v1844
    %2368 = vmatpush1.bf16.msra.mxu0 %v1843
    %2369 = vmatprep.subr.bf16.mxu0 %v1852
    %2370 = vmatpush1.bf16.msra.mxu0 %v1851
    %2371 = vmatprep.subr.bf16.mxu0 %v1860
    %2372 = vmatpush1.bf16.msra.mxu0 %v1859
    %2373 = vmatprep.subr.bf16.mxu0 %v1868
    %2374 = vmatpush1.bf16.msra.mxu0 %v1867
    %2375 = vmatprep.mubr.bf16.mxu0 %v676
    %2376 = vmatmul.mubr.bf16.gmra.mrb[0].mxu0 %v675
    %v2377 = vpop.f32.mrb[0].mxu0
    %v2378 = vadd.f32 %v948, %v2377
    %v2379 = vpop.f32.mrb[0].mxu0
    %v2380 = vadd.f32 %v952, %v2379
    %v2381 = vpop.f32.mrb[0].mxu0
    %v2382 = vadd.f32 %v948, %v2381
    %v2383 = vpop.f32.mrb[0].mxu0
    %v2384 = vadd.f32 %v952, %v2383
    %2385 = vdwg.mxu0
    %2386 = vmatprep.subr.bf16.mxu0 %v1876
    %2387 = vmatpush1.bf16.msra.mxu0 %v1875
    %2388 = vmatprep.subr.bf16.mxu0 %v1884
    %2389 = vmatpush1.bf16.msra.mxu0 %v1883
    %2390 = vmatprep.subr.bf16.mxu0 %v1892
    %2391 = vmatpush1.bf16.msra.mxu0 %v1891
    %2392 = vmatprep.subr.bf16.mxu0 %v1900
    %2393 = vmatpush1.bf16.msra.mxu0 %v1899
    %2394 = vmatprep.subr.bf16.mxu0 %v1908
    %2395 = vmatpush1.bf16.msra.mxu0 %v1907
    %2396 = vmatprep.subr.bf16.mxu0 %v1916
    %2397 = vmatpush1.bf16.msra.mxu0 %v1915
    %2398 = vmatprep.subr.bf16.mxu0 %v1924
    %2399 = vmatpush1.bf16.msra.mxu0 %v1923
    %2400 = vmatprep.subr.bf16.mxu0 %v1932
    %2401 = vmatpush1.bf16.msra.mxu0 %v1931
    %2402 = vmatprep.subr.bf16.mxu0 %v1940
    %2403 = vmatpush1.bf16.msra.mxu0 %v1939
    %2404 = vmatprep.subr.bf16.mxu0 %v1948
    %2405 = vmatpush1.bf16.msra.mxu0 %v1947
    %2406 = vmatprep.subr.bf16.mxu0 %v1956
    %2407 = vmatpush1.bf16.msra.mxu0 %v1955
    %2408 = vmatprep.subr.bf16.mxu0 %v1964
    %2409 = vmatpush1.bf16.msra.mxu0 %v1963
    %2410 = vmatprep.subr.bf16.mxu0 %v1972
    %2411 = vmatpush1.bf16.msra.mxu0 %v1971
    %2412 = vmatprep.subr.bf16.mxu0 %v1980
    %2413 = vmatpush1.bf16.msra.mxu0 %v1979
    %2414 = vmatprep.subr.bf16.mxu0 %v1988
    %2415 = vmatpush1.bf16.msra.mxu0 %v1987
    %2416 = vmatprep.subr.bf16.mxu0 %v1996
    %2417 = vmatpush1.bf16.msra.mxu0 %v1995
    %2418 = vmatprep.mubr.bf16.mxu0 %v678
    %2419 = vmatmul.mubr.bf16.gmra.mrb[0].mxu0 %v677
    %v2420 = vpop.f32.mrb[0].mxu0
    %v2421 = vadd.f32 %v2378, %v2420
    %v2422 = vpop.f32.mrb[0].mxu0
    %v2423 = vadd.f32 %v2380, %v2422
    %v2424 = vpop.f32.mrb[0].mxu0
    %v2425 = vadd.f32 %v2382, %v2424
    %v2426 = vpop.f32.mrb[0].mxu0
    %v2427 = vadd.f32 %v2384, %v2426
    %2428 = vdwg.mxu0
    %2429 = vmatprep.subr.bf16.mxu0 %v1750
    %2430 = vmatpush1.bf16.msra.mxu0 %v1749
    %2431 = vmatprep.subr.bf16.mxu0 %v1758
    %2432 = vmatpush1.bf16.msra.mxu0 %v1757
    %2433 = vmatprep.subr.bf16.mxu0 %v1766
    %2434 = vmatpush1.bf16.msra.mxu0 %v1765
    %2435 = vmatprep.subr.bf16.mxu0 %v1774
    %2436 = vmatpush1.bf16.msra.mxu0 %v1773
    %2437 = vmatprep.subr.bf16.mxu0 %v1782
    %2438 = vmatpush1.bf16.msra.mxu0 %v1781
    %2439 = vmatprep.subr.bf16.mxu0 %v1790
    %2440 = vmatpush1.bf16.msra.mxu0 %v1789
    %2441 = vmatprep.subr.bf16.mxu0 %v1798
    %2442 = vmatpush1.bf16.msra.mxu0 %v1797
    %2443 = vmatprep.subr.bf16.mxu0 %v1806
    %2444 = vmatpush1.bf16.msra.mxu0 %v1805
    %2445 = vmatprep.subr.bf16.mxu0 %v1814
    %2446 = vmatpush1.bf16.msra.mxu0 %v1813
    %2447 = vmatprep.subr.bf16.mxu0 %v1822
    %2448 = vmatpush1.bf16.msra.mxu0 %v1821
    %2449 = vmatprep.subr.bf16.mxu0 %v1830
    %2450 = vmatpush1.bf16.msra.mxu0 %v1829
    %2451 = vmatprep.subr.bf16.mxu0 %v1838
    %2452 = vmatpush1.bf16.msra.mxu0 %v1837
    %2453 = vmatprep.subr.bf16.mxu0 %v1846
    %2454 = vmatpush1.bf16.msra.mxu0 %v1845
    %2455 = vmatprep.subr.bf16.mxu0 %v1854
    %2456 = vmatpush1.bf16.msra.mxu0 %v1853
    %2457 = vmatprep.subr.bf16.mxu0 %v1862
    %2458 = vmatpush1.bf16.msra.mxu0 %v1861
    %2459 = vmatprep.subr.bf16.mxu0 %v1870
    %2460 = vmatpush1.bf16.msra.mxu0 %v1869
    %2461 = vmatprep.mubr.bf16.mxu0 %v676
    %2462 = vmatmul.mubr.bf16.gmra.mrb[0].mxu0 %v675
    %v2463 = vpop.f32.mrb[0].mxu0
    %v2464 = vadd.f32 %v956, %v2463
    %v2465 = vpop.f32.mrb[0].mxu0
    %v2466 = vadd.f32 %v960, %v2465
    %v2467 = vpop.f32.mrb[0].mxu0
    %v2468 = vadd.f32 %v956, %v2467
    %v2469 = vpop.f32.mrb[0].mxu0
    %v2470 = vadd.f32 %v960, %v2469
    %2471 = vdwg.mxu0
    %2472 = vmatprep.subr.bf16.mxu0 %v1878
    %2473 = vmatpush1.bf16.msra.mxu0 %v1877
    %2474 = vmatprep.subr.bf16.mxu0 %v1886
    %2475 = vmatpush1.bf16.msra.mxu0 %v1885
    %2476 = vmatprep.subr.bf16.mxu0 %v1894
    %2477 = vmatpush1.bf16.msra.mxu0 %v1893
    %2478 = vmatprep.subr.bf16.mxu0 %v1902
    %2479 = vmatpush1.bf16.msra.mxu0 %v1901
    %2480 = vmatprep.subr.bf16.mxu0 %v1910
    %2481 = vmatpush1.bf16.msra.mxu0 %v1909
    %2482 = vmatprep.subr.bf16.mxu0 %v1918
    %2483 = vmatpush1.bf16.msra.mxu0 %v1917
    %2484 = vmatprep.subr.bf16.mxu0 %v1926
    %2485 = vmatpush1.bf16.msra.mxu0 %v1925
    %2486 = vmatprep.subr.bf16.mxu0 %v1934
    %2487 = vmatpush1.bf16.msra.mxu0 %v1933
    %2488 = vmatprep.subr.bf16.mxu0 %v1942
    %2489 = vmatpush1.bf16.msra.mxu0 %v1941
    %2490 = vmatprep.subr.bf16.mxu0 %v1950
    %2491 = vmatpush1.bf16.msra.mxu0 %v1949
    %2492 = vmatprep.subr.bf16.mxu0 %v1958
    %2493 = vmatpush1.bf16.msra.mxu0 %v1957
    %2494 = vmatprep.subr.bf16.mxu0 %v1966
    %2495 = vmatpush1.bf16.msra.mxu0 %v1965
    %2496 = vmatprep.subr.bf16.mxu0 %v1974
    %2497 = vmatpush1.bf16.msra.mxu0 %v1973
    %2498 = vmatprep.subr.bf16.mxu0 %v1982
    %2499 = vmatpush1.bf16.msra.mxu0 %v1981
    %2500 = vmatprep.subr.bf16.mxu0 %v1990
    %2501 = vmatpush1.bf16.msra.mxu0 %v1989
    %2502 = vmatprep.subr.bf16.mxu0 %v1998
    %2503 = vmatpush1.bf16.msra.mxu0 %v1997
    %2504 = vmatprep.mubr.bf16.mxu0 %v678
    %2505 = vmatmul.mubr.bf16.gmra.mrb[0].mxu0 %v677
    %v2506 = vpop.f32.mrb[0].mxu0
    %v2507 = vadd.f32 %v2464, %v2506
    %v2508 = vpop.f32.mrb[0].mxu0
    %v2509 = vadd.f32 %v2466, %v2508
    %v2510 = vpop.f32.mrb[0].mxu0
    %v2511 = vadd.f32 %v2468, %v2510
    %v2512 = vpop.f32.mrb[0].mxu0
    %v2513 = vadd.f32 %v2470, %v2512
    %2514 = vdwg.mxu0
    %2515 = vmatprep.subr.bf16.mxu0 %v1752
    %2516 = vmatpush1.bf16.msra.mxu0 %v1751
    %2517 = vmatprep.subr.bf16.mxu0 %v1760
    %2518 = vmatpush1.bf16.msra.mxu0 %v1759
    %2519 = vmatprep.subr.bf16.mxu0 %v1768
    %2520 = vmatpush1.bf16.msra.mxu0 %v1767
    %2521 = vmatprep.subr.bf16.mxu0 %v1776
    %2522 = vmatpush1.bf16.msra.mxu0 %v1775
    %2523 = vmatprep.subr.bf16.mxu0 %v1784
    %2524 = vmatpush1.bf16.msra.mxu0 %v1783
    %2525 = vmatprep.subr.bf16.mxu0 %v1792
    %2526 = vmatpush1.bf16.msra.mxu0 %v1791
    %2527 = vmatprep.subr.bf16.mxu0 %v1800
    %2528 = vmatpush1.bf16.msra.mxu0 %v1799
    %2529 = vmatprep.subr.bf16.mxu0 %v1808
    %2530 = vmatpush1.bf16.msra.mxu0 %v1807
    %2531 = vmatprep.subr.bf16.mxu0 %v1816
    %2532 = vmatpush1.bf16.msra.mxu0 %v1815
    %2533 = vmatprep.subr.bf16.mxu0 %v1824
    %2534 = vmatpush1.bf16.msra.mxu0 %v1823
    %2535 = vmatprep.subr.bf16.mxu0 %v1832
    %2536 = vmatpush1.bf16.msra.mxu0 %v1831
    %2537 = vmatprep.subr.bf16.mxu0 %v1840
    %2538 = vmatpush1.bf16.msra.mxu0 %v1839
    %2539 = vmatprep.subr.bf16.mxu0 %v1848
    %2540 = vmatpush1.bf16.msra.mxu0 %v1847
    %2541 = vmatprep.subr.bf16.mxu0 %v1856
    %2542 = vmatpush1.bf16.msra.mxu0 %v1855
    %2543 = vmatprep.subr.bf16.mxu0 %v1864
    %2544 = vmatpush1.bf16.msra.mxu0 %v1863
    %2545 = vmatprep.subr.bf16.mxu0 %v1872
    %2546 = vmatpush1.bf16.msra.mxu0 %v1871
    %2547 = vmatprep.mubr.bf16.mxu0 %v676
    %2548 = vmatmul.mubr.bf16.gmra.mrb[0].mxu0 %v675
    %v2549 = vpop.f32.mrb[0].mxu0
    %v2550 = vadd.f32 %v964, %v2549
    %v2551 = vpop.f32.mrb[0].mxu0
    %v2552 = vadd.f32 %v968, %v2551
    %v2553 = vpop.f32.mrb[0].mxu0
    %v2554 = vadd.f32 %v964, %v2553
    %v2555 = vpop.f32.mrb[0].mxu0
    %v2556 = vadd.f32 %v968, %v2555
    %2557 = vdwg.mxu0
    %2558 = vmatprep.subr.bf16.mxu0 %v1880
    %2559 = vmatpush1.bf16.msra.mxu0 %v1879
    %2560 = vmatprep.subr.bf16.mxu0 %v1888
    %2561 = vmatpush1.bf16.msra.mxu0 %v1887
    %2562 = vmatprep.subr.bf16.mxu0 %v1896
    %2563 = vmatpush1.bf16.msra.mxu0 %v1895
    %2564 = vmatprep.subr.bf16.mxu0 %v1904
    %2565 = vmatpush1.bf16.msra.mxu0 %v1903
    %2566 = vmatprep.subr.bf16.mxu0 %v1912
    %2567 = vmatpush1.bf16.msra.mxu0 %v1911
    %2568 = vmatprep.subr.bf16.mxu0 %v1920
    %2569 = vmatpush1.bf16.msra.mxu0 %v1919
    %2570 = vmatprep.subr.bf16.mxu0 %v1928
    %2571 = vmatpush1.bf16.msra.mxu0 %v1927
    %2572 = vmatprep.subr.bf16.mxu0 %v1936
    %2573 = vmatpush1.bf16.msra.mxu0 %v1935
    %2574 = vmatprep.subr.bf16.mxu0 %v1944
    %2575 = vmatpush1.bf16.msra.mxu0 %v1943
    %2576 = vmatprep.subr.bf16.mxu0 %v1952
    %2577 = vmatpush1.bf16.msra.mxu0 %v1951
    %2578 = vmatprep.subr.bf16.mxu0 %v1960
    %2579 = vmatpush1.bf16.msra.mxu0 %v1959
    %2580 = vmatprep.subr.bf16.mxu0 %v1968
    %2581 = vmatpush1.bf16.msra.mxu0 %v1967
    %2582 = vmatprep.subr.bf16.mxu0 %v1976
    %2583 = vmatpush1.bf16.msra.mxu0 %v1975
    %2584 = vmatprep.subr.bf16.mxu0 %v1984
    %2585 = vmatpush1.bf16.msra.mxu0 %v1983
    %2586 = vmatprep.subr.bf16.mxu0 %v1992
    %2587 = vmatpush1.bf16.msra.mxu0 %v1991
    %2588 = vmatprep.subr.bf16.mxu0 %v2000
    %2589 = vmatpush1.bf16.msra.mxu0 %v1999
    %2590 = vmatprep.mubr.bf16.mxu0 %v678
    %2591 = vmatmul.mubr.bf16.gmra.mrb[0].mxu0 %v677
    %v2592 = vpop.f32.mrb[0].mxu0
    %v2593 = vadd.f32 %v2550, %v2592
    %v2594 = vpop.f32.mrb[0].mxu0
    %v2595 = vadd.f32 %v2552, %v2594
    %v2596 = vpop.f32.mrb[0].mxu0
    %v2597 = vadd.f32 %v2554, %v2596
    %v2598 = vpop.f32.mrb[0].mxu0
    %v2599 = vadd.f32 %v2556, %v2598
    %2600 = vdwg.mxu0
    %v2601 = vmul.f32 %v2335, %v2335
    %v2602 = vmul.f32 %v2337, %v2337
    %v2603 = vmul.f32 %v2421, %v2421
    %v2604 = vmul.f32 %v2423, %v2423
    %v2605 = vmul.f32 %v2507, %v2507
    %v2606 = vmul.f32 %v2509, %v2509
    %v2607 = vmul.f32 %v2593, %v2593
    %v2608 = vmul.f32 %v2595, %v2595
    %v2609 = vmul.f32 %v2339, %v2339
    %v2610 = vmul.f32 %v2341, %v2341
    %v2611 = vmul.f32 %v2425, %v2425
    %v2612 = vmul.f32 %v2427, %v2427
    %v2613 = vmul.f32 %v2511, %v2511
    %v2614 = vmul.f32 %v2513, %v2513
    %v2615 = vmul.f32 %v2597, %v2597
    %v2616 = vmul.f32 %v2599, %v2599
    %v2617 = vadd.f32 %v2601, %v2602
    %v2618 = vadd.f32 %v2617, %v2603
    %v2619 = vadd.f32 %v2618, %v2604
    %v2620 = vadd.f32 %v2619, %v2605
    %v2621 = vadd.f32 %v2620, %v2606
    %v2622 = vadd.f32 %v2621, %v2607
    %v2623 = vadd.f32 %v2622, %v2608
    %2624 = vadd.xlane.f32.xlu0 %v2623
    %v2625 = vpop.xlane.xlu0 %2624
    %v2626 = vadd.f32 %v2609, %v2610
    %v2627 = vadd.f32 %v2626, %v2611
    %v2628 = vadd.f32 %v2627, %v2612
    %v2629 = vadd.f32 %v2628, %v2613
    %v2630 = vadd.f32 %v2629, %v2614
    %v2631 = vadd.f32 %v2630, %v2615
    %v2632 = vadd.f32 %v2631, %v2616
    %2633 = vadd.xlane.f32.xlu0 %v2632
    %v2634 = vpop.xlane.xlu0 %2633
    %v2635 = vmax.f32 %v2625, 1e-24
    %v2636 = vmax.f32 %v2634, 1e-24
    %v2637 = vrsqrt.pop %v2635
    %v2638 = vrsqrt.pop %v2636
    %v2639 = vmul.f32 %v2335, %v2637
    %v2640 = vmul.f32 %v2337, %v2637
    %v2641 = vmul.f32 %v2421, %v2637
    %v2642 = vmul.f32 %v2423, %v2637
    %v2643 = vmul.f32 %v2507, %v2637
    %v2644 = vmul.f32 %v2509, %v2637
    %v2645 = vmul.f32 %v2593, %v2637
    %v2646 = vmul.f32 %v2595, %v2637
    %v2647 = vmul.f32 %v2339, %v2638
    %v2648 = vmul.f32 %v2341, %v2638
    %v2649 = vmul.f32 %v2425, %v2638
    %v2650 = vmul.f32 %v2427, %v2638
    %v2651 = vmul.f32 %v2511, %v2638
    %v2652 = vmul.f32 %v2513, %v2638
    %v2653 = vmul.f32 %v2597, %v2638
    %v2654 = vmul.f32 %v2599, %v2638
    %2655 = vst [vmem:[#allocation10] sm:$0xff] %v2639
    %2656 = vst [vmem:[#allocation10 + $0x8] sm:$0xff] %v2640
    %2657 = vst [vmem:[#allocation10 + $0x10] sm:$0xff] %v2641
    %2658 = vst [vmem:[#allocation10 + $0x18] sm:$0xff] %v2642
    %2659 = vst [vmem:[#allocation10 + $0x20] sm:$0xff] %v2643
    %2660 = vst [vmem:[#allocation10 + $0x28] sm:$0xff] %v2644
    %2661 = vst [vmem:[#allocation10 + $0x30] sm:$0xff] %v2645
    %2662 = vst [vmem:[#allocation10 + $0x38] sm:$0xff] %v2646
    %2663 = vst [vmem:[#allocation10 + $0x40] sm:$0xff] %v2647
    %2664 = vst [vmem:[#allocation10 + $0x48] sm:$0xff] %v2648
    %2665 = vst [vmem:[#allocation10 + $0x50] sm:$0xff] %v2649
    %2666 = vst [vmem:[#allocation10 + $0x58] sm:$0xff] %v2650
    %2667 = vst [vmem:[#allocation10 + $0x60] sm:$0xff] %v2651
    %2668 = vst [vmem:[#allocation10 + $0x68] sm:$0xff] %v2652
    %2669 = vst [vmem:[#allocation10 + $0x70] sm:$0xff] %v2653
    %2670 = vst [vmem:[#allocation10 + $0x78] sm:$0xff] %v2654
    // Predicated region
    $region46: #{tpu_custom_call.1} parent=1 // pred_check
      _
    $region47: #{tpu_custom_call.1} parent=1 // pred_check_branch
      %2672 = sbr.rel (0) target = $region49
    $region48: #{tpu_custom_call.1} parent=1 // pred_region
      %s2674 = ssub.s32 2048, 2048
      %2675 = vsyncadd [#allocation4], %s2674
      %s2676 = sshll.u32 [#allocation10], 4
      %s2677 = int_to_ptr.vmem [resolvable:$true] %s2676
      %2682 = dma.vmem_to_hbm [thread:$0]  %s2677, 2048, %s7, [#allocation4], 1024, 1024, 64
    $region49: #{tpu_custom_call.1} parent=1 // pred_fallthru
      _
    // Predicated region
    $region50: #{tpu_custom_call.1} parent=1 // pred_check
      _
    $region51: #{tpu_custom_call.1} parent=1 // pred_check_branch
      %2684 = sbr.rel (0) target = $region53
    $region52: #{tpu_custom_call.1} parent=1 // pred_region
      %2685 = dma.done [#allocation4], 2048
    $region53: #{tpu_custom_call.1} parent=1 // pred_fallthru
      _
    %2686 = vsyncpa [#allocation3], 1
    %2687 = vsyncpa [#allocation6], 1
    %2688 = vsyncpa [#allocation9], 1
    %2689 = vsyncpa [#allocation4], 1

</llo_original>
